<compile_context>
chip_gen: v7x
topology: tpu7x:2x2x1
jax: 0.10.0
libtpu: 0.0.40
codegen_flags: <defaults>
</compile_context>

<pallas_src>
import functools

import jax
import jax.numpy as jnp
from jax.experimental import pallas as pl
from jax.experimental.pallas import tpu as pltpu

LAMBDA_CLASS = 1.0
LAMBDA_NOOBJ = 10.0
LAMBDA_OBJ = 1.0
LAMBDA_BOX = 10.0

# The reference module's dead code: only the box term reaches combined_loss.
COMPUTE_UNUSED_TERMS = False

_LANES = 128
_MAX_TILE_SUBLANES = 256            # 256 sublanes x 128 lanes per grid step
_TILE_BYTES_BUDGET = 2 * 1024 * 1024    # pred+targ bytes per grid step (pre double-buffer)
_SMALL_PATH_BYTES = 2 * 1024 * 1024     # below this, fuse everything into one grid step


def _round_up(x, m):
    return ((x + m - 1) // m) * m


def _sublane_pack(dtype):
    # native sublane packing: 8 for f32, 16 for bf16, 32 for int8/fp8
    return max(8, 32 // dtype.itemsize)


# --------------------------------------------------------------------------- #
# Kernel
# --------------------------------------------------------------------------- #
def _yolo_kernel(pred_ref, targ_ref, out_ref, *, include_unused):
    """One grid step: `na` (scale, anchor[, part]) segments x one cell tile.

    pred_ref : (na, Cp, m, 128)  Cp = 4 box channels (default) or 5+C (full)
    targ_ref : (na, Ct, m, 128)  default: [obj, x, y, log(1e-16+w/aw), log(...h/ah)]
                                 full:    [obj, x, y, w/aw, h/ah, class, aw, ah]
    out_ref  : (na, 8, 128) f32  lane-parallel partial sums, resident across the
               tile axis; rows = [box_sq, obj_cnt, bce, noobj_cnt, objmse, ce, 0, 0].
    """
    t = pl.program_id(1)
    na = pred_ref.shape[0]
    off = 1 if include_unused else 0

    ridx = jax.lax.broadcasted_iota(jnp.int32, (8, _LANES), 0)

    for a in range(na):
        def pch(c, a=a):
            return pred_ref[a, c].astype(jnp.float32)

        def tch(c, a=a):
            return targ_ref[a, c].astype(jnp.float32)

        t0 = tch(0)
        tx, ty = tch(1), tch(2)
        obj = t0 == 1.0                       # padded cells are never 1.0

        px, py = pch(off + 0), pch(off + 1)
        pw, ph = pch(off + 2), pch(off + 3)
        sx = jax.nn.sigmoid(px)
        sy = jax.nn.sigmoid(py)

        if include_unused:
            twn, thn = tch(3), tch(4)
            twl = jnp.log(1e-16 + twn)
            thl = jnp.log(1e-16 + thn)
        else:
            twl, thl = tch(3), tch(4)         # log folded into the packer

        # ---- box loss (the only term that reaches the returned loss) ----
        sq = (sx - tx) ** 2 + (sy - ty) ** 2 + (pw - twl) ** 2 + (ph - thl) ** 2
        row_box = jnp.sum(jnp.where(obj, sq, 0.0), axis=0, keepdims=True)   # (1,128)
        row_obj = jnp.sum(obj.astype(jnp.float32), axis=0, keepdims=True)

        contrib = (jnp.where(ridx == 0, row_box, 0.0)
                   + jnp.where(ridx == 1, row_obj, 0.0))

        if include_unused:
            # ---- terms the original module computes but never adds (dead code) ----
            p0 = pch(0)
            noobj = t0 == 0.0                 # padded cells carry t0 == -1 -> excluded

            e = jnp.exp(-jnp.abs(p0))
            inv_1pe = pl.reciprocal(1.0 + e, approx=True)
            sig_p0 = jnp.where(p0 >= 0.0, inv_1pe, e * inv_1pe)
            bce = jnp.maximum(p0, 0.0) - p0 * t0 + jnp.log(1.0 + e)
            row_bce = jnp.sum(jnp.where(noobj, bce, 0.0), axis=0, keepdims=True)
            row_noobj = jnp.sum(noobj.astype(jnp.float32), axis=0, keepdims=True)

            # midpoint IoU between decoded prediction box and raw target box
            aw_t, ah_t = tch(6), tch(7)
            tw, th = twn * aw_t, thn * ah_t
            pwd = jnp.exp(pw) * aw_t
            phd = jnp.exp(ph) * ah_t
            b1x1, b1x2 = sx - pwd * 0.5, sx + pwd * 0.5
            b1y1, b1y2 = sy - phd * 0.5, sy + phd * 0.5
            b2x1, b2x2 = tx - tw * 0.5, tx + tw * 0.5
            b2y1, b2y2 = ty - th * 0.5, ty + th * 0.5
            iw = jnp.maximum(jnp.minimum(b1x2, b2x2) - jnp.maximum(b1x1, b2x1), 0.0)
            ih = jnp.maximum(jnp.minimum(b1y2, b2y2) - jnp.maximum(b1y1, b2y1), 0.0)
            inter = iw * ih
            area1 = jnp.abs((b1x2 - b1x1) * (b1y2 - b1y1))
            area2 = jnp.abs((b2x2 - b2x1) * (b2y2 - b2y1))
            iou = inter * pl.reciprocal(area1 + area2 - inter + 1e-6, approx=True)
            row_objmse = jnp.sum(jnp.where(obj, (sig_p0 - iou * t0) ** 2, 0.0),
                                 axis=0, keepdims=True)

            # cross-entropy over class logits
            logits = pred_ref[a, 5:].astype(jnp.float32)        # (C, m, 128)
            label = tch(5)
            m = jnp.max(logits, axis=0, keepdims=True)
            lse = m + jnp.log(jnp.sum(jnp.exp(logits - m), axis=0, keepdims=True))
            cls_iota = jax.lax.broadcasted_iota(jnp.float32, logits.shape, 0)
            picked = jnp.sum(jnp.where(cls_iota == label[None], logits, 0.0),
                             axis=0, keepdims=True)
            ce = (lse - picked)[0]
            row_ce = jnp.sum(jnp.where(obj, ce, 0.0), axis=0, keepdims=True)

            for r, v in ((2, row_bce), (3, row_noobj), (4, row_objmse), (5, row_ce)):
                contrib = contrib + jnp.where(ridx == r, v, 0.0)

        # single dense (8,128) store per segment per tile
        @pl.when(t == 0)
        def _(a=a, contrib=contrib):
            out_ref[a] = contrib

        @pl.when(t != 0)
        def _(a=a, contrib=contrib):
            out_ref[a] = out_ref[a] + contrib


# --------------------------------------------------------------------------- #
# Packing (fuses the anchor divide / log / transpose into one XLA producer)
# --------------------------------------------------------------------------- #
def _pack_scale(pred, targ, anchors_i, include_unused):
    """(B, A, S, S, C) -> anchor-major, channel-major, cells on the lane axis."""
    B, A, S, _, _ = pred.shape
    n = B * S * S

    if not include_unused:
        pred = pred[..., 1:5]                 # only the 4 box channels are needed
    cp = pred.shape[-1]

    a_b = anchors_i.astype(jnp.float32).reshape(1, A, 1, 1, 2)
    wh = targ[..., 3:5].astype(jnp.float32) / a_b          # divide in f32
    if include_unused:
        aw_b = jnp.broadcast_to(a_b, wh.shape).astype(targ.dtype)
        t_p = jnp.concatenate([targ[..., 0:3], wh.astype(targ.dtype),
                               targ[..., 5:6], aw_b], axis=-1)
    else:
        # fold log(1e-16 + w/anchor) into the producer (fuses with the transpose)
        t_p = jnp.concatenate([targ[..., 0:3],
                               jnp.log(1e-16 + wh).astype(targ.dtype)], axis=-1)
    ct = t_p.shape[-1]

    p_cm = jnp.transpose(pred, (1, 4, 0, 2, 3)).reshape(A, cp, n)
    t_cm = jnp.transpose(t_p, (1, 4, 0, 2, 3)).reshape(A, ct, n)
    return p_cm, t_cm, n


def _to_slab(p_cm, t_cm, n, mseg, include_unused):
    """Pad flattened cells to mseg*128 columns and fold to lane-dense slabs."""
    A, cp, _ = p_cm.shape
    ct = t_cm.shape[1]
    pad = mseg * _LANES - n
    p_s = jnp.pad(p_cm, ((0, 0), (0, 0), (0, pad))).reshape(A, cp, mseg, _LANES)
    if include_unused:
        # pad the objectness channel with -1 so padded cells are neither obj nor noobj
        t_obj = jnp.pad(t_cm[:, 0:1], ((0, 0), (0, 0), (0, pad)), constant_values=-1.0)
        t_rest = jnp.pad(t_cm[:, 1:], ((0, 0), (0, 0), (0, pad)))
        t_s = jnp.concatenate([t_obj, t_rest], axis=1).reshape(A, ct, mseg, _LANES)
    else:
        # zero padding: t0 == 1.0 already excludes padded cells
        t_s = jnp.pad(t_cm, ((0, 0), (0, 0), (0, pad))).reshape(A, ct, mseg, _LANES)
    return p_s, t_s


# --------------------------------------------------------------------------- #
# Pallas call wrappers
# --------------------------------------------------------------------------- #
def _tiled_scale_sums(p_cm, t_cm, n, include_unused):
    """Per-scale call; per-scale slab width; returns (A, 8) per-anchor sums."""
    A, cp, _ = p_cm.shape
    ct = t_cm.shape[1]
    pack = max(_sublane_pack(p_cm.dtype), _sublane_pack(t_cm.dtype))
    m_raw = pl.cdiv(n, _LANES)

    # megacore balance (v7x): split each anchor's cell range into 2 parallel parts
    parts = 2 if m_raw >= 2 * pack else 1
    mpart_raw = pl.cdiv(m_raw, parts)

    bytes_per_sublane = (cp * p_cm.dtype.itemsize + ct * t_cm.dtype.itemsize) * _LANES
    vmem_cap = max(pack, (_TILE_BYTES_BUDGET // bytes_per_sublane) // pack * pack)
    mtile = min(_round_up(mpart_raw, pack), _MAX_TILE_SUBLANES, vmem_cap)
    num_t = pl.cdiv(mpart_raw, mtile)
    mseg = parts * num_t * mtile

    p_s, t_s = _to_slab(p_cm, t_cm, n, mseg, include_unused)

    kernel = functools.partial(_yolo_kernel, include_unused=include_unused)
    out = pl.pallas_call(
        kernel,
        out_shape=jax.ShapeDtypeStruct((A * parts, 8, _LANES), jnp.float32),
        grid_spec=pl.GridSpec(
            grid=(A * parts, num_t),
            in_specs=[
                pl.BlockSpec((1, cp, mtile, _LANES),
                             lambda s, t: (s // parts, 0, (s % parts) * num_t + t, 0)),
                pl.BlockSpec((1, ct, mtile, _LANES),
                             lambda s, t: (s // parts, 0, (s % parts) * num_t + t, 0)),
            ],
            out_specs=pl.BlockSpec((1, 8, _LANES), lambda s, t: (s, 0, 0)),
        ),
        compiler_params=pltpu.CompilerParams(
            dimension_semantics=("parallel", "arbitrary")),
    )(p_s, t_s)

    # final lane reduce in XLA, then sum the two parallel parts per anchor
    return out.sum(axis=-1).reshape(A, parts, 8).sum(axis=1)        # (A, 8)


def _small_path_sums(packed, include_unused):
    """Tiny shapes: all scales & anchors fused into ONE pallas_call, one grid step."""
    pack = max(max(_sublane_pack(p.dtype), _sublane_pack(t.dtype)) for p, t, _ in packed)
    mseg = max(_round_up(pl.cdiv(n, _LANES), pack) for _, _, n in packed)

    p_list, t_list = [], []
    for p_cm, t_cm, n in packed:
        p_s, t_s = _to_slab(p_cm, t_cm, n, mseg, include_unused)
        p_list.append(p_s)
        t_list.append(t_s)
    pred_all = jnp.concatenate(p_list, axis=0)      # (num_seg, Cp, mseg, 128)
    targ_all = jnp.concatenate(t_list, axis=0)      # (num_seg, Ct, mseg, 128)
    num_seg, cp = pred_all.shape[0], pred_all.shape[1]
    ct = targ_all.shape[1]

    kernel = functools.partial(_yolo_kernel, include_unused=include_unused)
    out = pl.pallas_call(
        kernel,
        out_shape=jax.ShapeDtypeStruct((num_seg, 8, _LANES), jnp.float32),
        grid_spec=pl.GridSpec(
            grid=(1, 1),
            in_specs=[
                pl.BlockSpec((num_seg, cp, mseg, _LANES), lambda s, t: (0, 0, 0, 0)),
                pl.BlockSpec((num_seg, ct, mseg, _LANES), lambda s, t: (0, 0, 0, 0)),
            ],
            out_specs=pl.BlockSpec((num_seg, 8, _LANES), lambda s, t: (0, 0, 0)),
        ),
        compiler_params=pltpu.CompilerParams(
            dimension_semantics=("arbitrary", "arbitrary")),
    )(pred_all, targ_all)
    return out.sum(axis=-1)                          # (num_scales * A, 8)


@jax.jit
def yolo_loss(predictions, targets, scaled_anchors):
    num_scales = len(predictions)
    A = predictions[0].shape[1]
    include_unused = COMPUTE_UNUSED_TERMS

    packed = [_pack_scale(predictions[i], targets[i], scaled_anchors[i], include_unused)
              for i in range(num_scales)]

    total_bytes = sum(p.size * p.dtype.itemsize + t.size * t.dtype.itemsize
                      for p, t, _ in packed)

    if total_bytes <= _SMALL_PATH_BYTES:
        seg = _small_path_sums(packed, include_unused)
        scale_sums = seg.reshape(num_scales, A, 8).sum(axis=1)           # (scales, 8)
    else:
        scale_sums = jnp.stack(
            [_tiled_scale_sums(p, t, n, include_unused).sum(axis=0)
             for p, t, n in packed], axis=0)                             # (scales, 8)

    combined = jnp.float32(0.0)
    for i in range(num_scales):
        sum_box, cnt_obj = scale_sums[i, 0], scale_sums[i, 1]
        box_loss = sum_box / (4.0 * cnt_obj)
        # Faithful to the reference: only the box term accumulates; the other
        # three weighted terms are dead code (bare `+expr` statements).
        combined = combined + LAMBDA_BOX * box_loss
        if include_unused:
            no_object_loss = scale_sums[i, 2] / scale_sums[i, 3]
            object_loss = scale_sums[i, 4] / cnt_obj
            class_loss = scale_sums[i, 5] / cnt_obj
            _ = (LAMBDA_OBJ * object_loss, LAMBDA_NOOBJ * no_object_loss,
                 LAMBDA_CLASS * class_loss)
    # TODO(synk): the original forward also print()s each weighted loss term per
    # scale; host-side printing is omitted here.
    return combined


# --------------------------------------------------------------------------- #
# Pure-JAX reference (only the box term contributes, matching the module)
# --------------------------------------------------------------------------- #
def _yolo_loss_reference(predictions, targets, scaled_anchors):
    combined = jnp.float32(0.0)
    for i in range(3):
        pred = predictions[i].astype(jnp.float32)
        targ = targets[i].astype(jnp.float32)
        anch = scaled_anchors[i].reshape(1, 3, 1, 1, 2)
        obj = targ[..., 0] == 1.0
        cnt_obj = jnp.sum(obj.astype(jnp.float32))
        sig_xy = jax.nn.sigmoid(pred[..., 1:3])
        targ_wh_log = jnp.log(1e-16 + targ[..., 3:5] / anch)
        box_pred = jnp.concatenate([sig_xy, pred[..., 3:5]], axis=-1)
        box_targ = jnp.concatenate([targ[..., 1:3], targ_wh_log], axis=-1)
        sq = (box_pred - box_targ) ** 2
        box_loss = jnp.sum(jnp.where(obj[..., None], sq, 0.0)) / (4.0 * cnt_obj)
        combined = combined + LAMBDA_BOX * box_loss
    return combined


if __name__ == "__main__":
    key = jax.random.PRNGKey(0)
    B, A, C = 2, 3, 4
    S_list = (8, 4, 2)

    # Deterministic "config" anchors, scaled by the per-scale grid size S.
    ANCHORS = jnp.array(
        [[(0.28, 0.22), (0.38, 0.48), (0.90, 0.78)],
         [(0.07, 0.15), (0.15, 0.11), (0.14, 0.29)],
         [(0.02, 0.03), (0.04, 0.07), (0.08, 0.06)]], dtype=jnp.float32)
    scaled_anchors = ANCHORS * jnp.array(S_list, jnp.float32)[:, None, None]   # (3, 3, 2)

    predictions, targets = [], []
    for i, S in enumerate(S_list):
        key, kp, kobj, kxy, kwh, kcls = jax.random.split(key, 6)
        pred = jax.random.normal(kp, (B, A, S, S, 5 + C), dtype=jnp.float32)
        obj_flag = (jax.random.uniform(kobj, (B, A, S, S, 1)) < 0.3).astype(jnp.float32)
        # guarantee at least one obj and one noobj cell per scale
        obj_flag = obj_flag.at[0, 0, 0, 0, 0].set(1.0)
        obj_flag = obj_flag.at[0, 0, 0, 1, 0].set(0.0)
        xy = jax.random.uniform(kxy, (B, A, S, S, 2), minval=0.05, maxval=0.95)
        wh = jax.random.uniform(kwh, (B, A, S, S, 2), minval=0.1, maxval=3.0)
        cls = jax.random.randint(kcls, (B, A, S, S, 1), 0, C).astype(jnp.float32)
        targets.append(jnp.concatenate([obj_flag, xy, wh, cls], axis=-1))
        predictions.append(pred)

    loss = yolo_loss(predictions, targets, scaled_anchors)
    loss = jax.block_until_ready(loss)

    ref = _yolo_loss_reference(predictions, targets, scaled_anchors)
    assert jnp.allclose(loss, ref, rtol=1e-4, atol=1e-4), (loss, ref)
    print("KERNEL_OK")
</pallas_src>

<mosaic_0001>
module attributes {stable_mosaic.version = 11 : i64} {
  func.func @_yolo_kernel(%arg0: i32, %arg1: i32, %arg2: memref<9x4x8x128xf32, #tpu.memory_space<vmem>>, %arg3: memref<9x5x8x128xf32, #tpu.memory_space<vmem>>, %arg4: memref<9x8x128xf32, #tpu.memory_space<vmem>>) attributes {dimension_semantics = [#tpu.dimension_semantics<arbitrary>, #tpu.dimension_semantics<arbitrary>], iteration_bounds = array<i64: 1, 1>, scalar_prefetch = 0 : i64, scratch_operands = 0 : i64, tpu.core_type = #tpu.core_type<tc>, window_params = [{pipeline_mode = #tpu.pipeline_mode<synchronous>, transform_indices = @transform_0, window_bounds = array<i64: 9, 4, 8, 128>}, {pipeline_mode = #tpu.pipeline_mode<synchronous>, transform_indices = @transform_1, window_bounds = array<i64: 9, 5, 8, 128>}, {pipeline_mode = #tpu.pipeline_mode<synchronous>, transform_indices = @transform_2, window_bounds = array<i64: 9, 8, 128>}]} {
    %0 = tpu.iota {dimensions = array<i32: 0>} : vector<8x128xi32>
    %c0 = arith.constant 0 : index
    %c0_0 = arith.constant 0 : index
    %c0_1 = arith.constant 0 : index
    %c0_2 = arith.constant 0 : index
    %1 = vector.load %arg3[%c0, %c0_0, %c0_1, %c0_2] : memref<9x5x8x128xf32, #tpu.memory_space<vmem>>, vector<1x1x8x128xf32>
    %2 = vector.shape_cast %1 : vector<1x1x8x128xf32> to vector<8x128xf32>
    %c0_3 = arith.constant 0 : index
    %c1 = arith.constant 1 : index
    %c0_4 = arith.constant 0 : index
    %c0_5 = arith.constant 0 : index
    %3 = vector.load %arg3[%c0_3, %c1, %c0_4, %c0_5] : memref<9x5x8x128xf32, #tpu.memory_space<vmem>>, vector<1x1x8x128xf32>
    %4 = vector.shape_cast %3 : vector<1x1x8x128xf32> to vector<8x128xf32>
    %c0_6 = arith.constant 0 : index
    %c2 = arith.constant 2 : index
    %c0_7 = arith.constant 0 : index
    %c0_8 = arith.constant 0 : index
    %5 = vector.load %arg3[%c0_6, %c2, %c0_7, %c0_8] : memref<9x5x8x128xf32, #tpu.memory_space<vmem>>, vector<1x1x8x128xf32>
    %6 = vector.shape_cast %5 : vector<1x1x8x128xf32> to vector<8x128xf32>
    %cst = arith.constant 1.000000e+00 : f32
    %7 = vector.broadcast %cst : f32 to vector<8x128xf32>
    %8 = arith.cmpf oeq, %2, %7 : vector<8x128xf32>
    %c0_9 = arith.constant 0 : index
    %c0_10 = arith.constant 0 : index
    %c0_11 = arith.constant 0 : index
    %c0_12 = arith.constant 0 : index
    %9 = vector.load %arg2[%c0_9, %c0_10, %c0_11, %c0_12] : memref<9x4x8x128xf32, #tpu.memory_space<vmem>>, vector<1x1x8x128xf32>
    %10 = vector.shape_cast %9 : vector<1x1x8x128xf32> to vector<8x128xf32>
    %c0_13 = arith.constant 0 : index
    %c1_14 = arith.constant 1 : index
    %c0_15 = arith.constant 0 : index
    %c0_16 = arith.constant 0 : index
    %11 = vector.load %arg2[%c0_13, %c1_14, %c0_15, %c0_16] : memref<9x4x8x128xf32, #tpu.memory_space<vmem>>, vector<1x1x8x128xf32>
    %12 = vector.shape_cast %11 : vector<1x1x8x128xf32> to vector<8x128xf32>
    %c0_17 = arith.constant 0 : index
    %c2_18 = arith.constant 2 : index
    %c0_19 = arith.constant 0 : index
    %c0_20 = arith.constant 0 : index
    %13 = vector.load %arg2[%c0_17, %c2_18, %c0_19, %c0_20] : memref<9x4x8x128xf32, #tpu.memory_space<vmem>>, vector<1x1x8x128xf32>
    %14 = vector.shape_cast %13 : vector<1x1x8x128xf32> to vector<8x128xf32>
    %c0_21 = arith.constant 0 : index
    %c3 = arith.constant 3 : index
    %c0_22 = arith.constant 0 : index
    %c0_23 = arith.constant 0 : index
    %15 = vector.load %arg2[%c0_21, %c3, %c0_22, %c0_23] : memref<9x4x8x128xf32, #tpu.memory_space<vmem>>, vector<1x1x8x128xf32>
    %16 = vector.shape_cast %15 : vector<1x1x8x128xf32> to vector<8x128xf32>
    %17 = arith.negf %10 : vector<8x128xf32>
    %18 = math.exp %17 : vector<8x128xf32>
    %cst_24 = arith.constant 1.000000e+00 : f32
    %19 = vector.broadcast %cst_24 : f32 to vector<8x128xf32>
    %20 = arith.addf %19, %18 : vector<8x128xf32>
    %21 = arith.divf %19, %20 : vector<8x128xf32>
    %22 = arith.negf %12 : vector<8x128xf32>
    %23 = math.exp %22 : vector<8x128xf32>
    %cst_25 = arith.constant 1.000000e+00 : f32
    %24 = vector.broadcast %cst_25 : f32 to vector<8x128xf32>
    %25 = arith.addf %24, %23 : vector<8x128xf32>
    %26 = arith.divf %24, %25 : vector<8x128xf32>
    %c0_26 = arith.constant 0 : index
    %c3_27 = arith.constant 3 : index
    %c0_28 = arith.constant 0 : index
    %c0_29 = arith.constant 0 : index
    %27 = vector.load %arg3[%c0_26, %c3_27, %c0_28, %c0_29] : memref<9x5x8x128xf32, #tpu.memory_space<vmem>>, vector<1x1x8x128xf32>
    %28 = vector.shape_cast %27 : vector<1x1x8x128xf32> to vector<8x128xf32>
    %c0_30 = arith.constant 0 : index
    %c4 = arith.constant 4 : index
    %c0_31 = arith.constant 0 : index
    %c0_32 = arith.constant 0 : index
    %29 = vector.load %arg3[%c0_30, %c4, %c0_31, %c0_32] : memref<9x5x8x128xf32, #tpu.memory_space<vmem>>, vector<1x1x8x128xf32>
    %30 = vector.shape_cast %29 : vector<1x1x8x128xf32> to vector<8x128xf32>
    %31 = arith.subf %21, %4 : vector<8x128xf32>
    %32 = arith.mulf %31, %31 : vector<8x128xf32>
    %33 = arith.subf %26, %6 : vector<8x128xf32>
    %34 = arith.mulf %33, %33 : vector<8x128xf32>
    %35 = arith.addf %32, %34 : vector<8x128xf32>
    %36 = arith.subf %14, %28 : vector<8x128xf32>
    %37 = arith.mulf %36, %36 : vector<8x128xf32>
    %38 = arith.addf %35, %37 : vector<8x128xf32>
    %39 = arith.subf %16, %30 : vector<8x128xf32>
    %40 = arith.mulf %39, %39 : vector<8x128xf32>
    %41 = arith.addf %38, %40 : vector<8x128xf32>
    %cst_33 = arith.constant 0.000000e+00 : f32
    %42 = vector.broadcast %cst_33 : f32 to vector<8x128xf32>
    %43 = arith.select %8, %41, %42 : vector<8x128xi1>, vector<8x128xf32>
    %cst_34 = arith.constant dense<0.000000e+00> : vector<128xf32>
    %44 = vector.multi_reduction <add>, %43, %cst_34 [0] : vector<8x128xf32> to vector<128xf32>
    %45 = vector.shape_cast %44 : vector<128xf32> to vector<1x128xf32>
    %46 = arith.extui %8 : vector<8x128xi1> to vector<8x128xi32>
    %47 = arith.sitofp %46 : vector<8x128xi32> to vector<8x128xf32>
    %cst_35 = arith.constant dense<0.000000e+00> : vector<128xf32>
    %48 = vector.multi_reduction <add>, %47, %cst_35 [0] : vector<8x128xf32> to vector<128xf32>
    %49 = vector.shape_cast %48 : vector<128xf32> to vector<1x128xf32>
    %c0_i32 = arith.constant 0 : i32
    %50 = vector.broadcast %c0_i32 : i32 to vector<8x128xi32>
    %51 = arith.cmpi eq, %0, %50 : vector<8x128xi32>
    %cst_36 = arith.constant 0.000000e+00 : f32
    %52 = vector.shape_cast %45 : vector<1x128xf32> to vector<1x128xf32>
    %53 = vector.broadcast %52 : vector<1x128xf32> to vector<8x128xf32>
    %54 = vector.broadcast %cst_36 : f32 to vector<8x128xf32>
    %55 = arith.select %51, %53, %54 : vector<8x128xi1>, vector<8x128xf32>
    %c1_i32 = arith.constant 1 : i32
    %56 = vector.broadcast %c1_i32 : i32 to vector<8x128xi32>
    %57 = arith.cmpi eq, %0, %56 : vector<8x128xi32>
    %cst_37 = arith.constant 0.000000e+00 : f32
    %58 = vector.shape_cast %49 : vector<1x128xf32> to vector<1x128xf32>
    %59 = vector.broadcast %58 : vector<1x128xf32> to vector<8x128xf32>
    %60 = vector.broadcast %cst_37 : f32 to vector<8x128xf32>
    %61 = arith.select %57, %59, %60 : vector<8x128xi1>, vector<8x128xf32>
    %62 = arith.addf %55, %61 : vector<8x128xf32>
    %c0_i32_38 = arith.constant 0 : i32
    %63 = arith.cmpi eq, %arg1, %c0_i32_38 : i32
    %64 = arith.extui %63 : i1 to i32
    %c0_i32_39 = arith.constant 0 : i32
    %65 = arith.cmpi ne, %64, %c0_i32_39 : i32
    scf.if %65 {
      %c0_438 = arith.constant 0 : index
      %c0_439 = arith.constant 0 : index
      %c0_440 = arith.constant 0 : index
      %613 = vector.load %arg4[%c0_438, %c0_439, %c0_440] : memref<9x8x128xf32, #tpu.memory_space<vmem>>, vector<1x8x128xf32>
      %614 = vector.shape_cast %613 : vector<1x8x128xf32> to vector<8x128xf32>
      %615 = vector.shape_cast %62 : vector<8x128xf32> to vector<1x8x128xf32>
      tpu.vector_store %arg4[%c0_438, %c0_439, %c0_440], %615 {strides = array<i32>} : memref<9x8x128xf32, #tpu.memory_space<vmem>>, vector<1x8x128xf32>,
    } else {
    }
    %c0_i32_40 = arith.constant 0 : i32
    %66 = arith.cmpi ne, %arg1, %c0_i32_40 : i32
    %67 = arith.extui %66 : i1 to i32
    %c0_i32_41 = arith.constant 0 : i32
    %68 = arith.cmpi ne, %67, %c0_i32_41 : i32
    scf.if %68 {
      %c0_438 = arith.constant 0 : index
      %c0_439 = arith.constant 0 : index
      %c0_440 = arith.constant 0 : index
      %613 = vector.load %arg4[%c0_438, %c0_439, %c0_440] : memref<9x8x128xf32, #tpu.memory_space<vmem>>, vector<1x8x128xf32>
      %614 = vector.shape_cast %613 : vector<1x8x128xf32> to vector<8x128xf32>
      %615 = arith.addf %614, %62 : vector<8x128xf32>
      %c0_441 = arith.constant 0 : index
      %c0_442 = arith.constant 0 : index
      %c0_443 = arith.constant 0 : index
      %616 = vector.load %arg4[%c0_441, %c0_442, %c0_443] : memref<9x8x128xf32, #tpu.memory_space<vmem>>, vector<1x8x128xf32>
      %617 = vector.shape_cast %616 : vector<1x8x128xf32> to vector<8x128xf32>
      %618 = vector.shape_cast %615 : vector<8x128xf32> to vector<1x8x128xf32>
      tpu.vector_store %arg4[%c0_441, %c0_442, %c0_443], %618 {strides = array<i32>} : memref<9x8x128xf32, #tpu.memory_space<vmem>>, vector<1x8x128xf32>,
    } else {
    }
    %c1_42 = arith.constant 1 : index
    %c0_43 = arith.constant 0 : index
    %c0_44 = arith.constant 0 : index
    %c0_45 = arith.constant 0 : index
    %69 = vector.load %arg3[%c1_42, %c0_43, %c0_44, %c0_45] : memref<9x5x8x128xf32, #tpu.memory_space<vmem>>, vector<1x1x8x128xf32>
    %70 = vector.shape_cast %69 : vector<1x1x8x128xf32> to vector<8x128xf32>
    %c1_46 = arith.constant 1 : index
    %c1_47 = arith.constant 1 : index
    %c0_48 = arith.constant 0 : index
    %c0_49 = arith.constant 0 : index
    %71 = vector.load %arg3[%c1_46, %c1_47, %c0_48, %c0_49] : memref<9x5x8x128xf32, #tpu.memory_space<vmem>>, vector<1x1x8x128xf32>
    %72 = vector.shape_cast %71 : vector<1x1x8x128xf32> to vector<8x128xf32>
    %c1_50 = arith.constant 1 : index
    %c2_51 = arith.constant 2 : index
    %c0_52 = arith.constant 0 : index
    %c0_53 = arith.constant 0 : index
    %73 = vector.load %arg3[%c1_50, %c2_51, %c0_52, %c0_53] : memref<9x5x8x128xf32, #tpu.memory_space<vmem>>, vector<1x1x8x128xf32>
    %74 = vector.shape_cast %73 : vector<1x1x8x128xf32> to vector<8x128xf32>
    %cst_54 = arith.constant 1.000000e+00 : f32
    %75 = vector.broadcast %cst_54 : f32 to vector<8x128xf32>
    %76 = arith.cmpf oeq, %70, %75 : vector<8x128xf32>
    %c1_55 = arith.constant 1 : index
    %c0_56 = arith.constant 0 : index
    %c0_57 = arith.constant 0 : index
    %c0_58 = arith.constant 0 : index
    %77 = vector.load %arg2[%c1_55, %c0_56, %c0_57, %c0_58] : memref<9x4x8x128xf32, #tpu.memory_space<vmem>>, vector<1x1x8x128xf32>
    %78 = vector.shape_cast %77 : vector<1x1x8x128xf32> to vector<8x128xf32>
    %c1_59 = arith.constant 1 : index
    %c1_60 = arith.constant 1 : index
    %c0_61 = arith.constant 0 : index
    %c0_62 = arith.constant 0 : index
    %79 = vector.load %arg2[%c1_59, %c1_60, %c0_61, %c0_62] : memref<9x4x8x128xf32, #tpu.memory_space<vmem>>, vector<1x1x8x128xf32>
    %80 = vector.shape_cast %79 : vector<1x1x8x128xf32> to vector<8x128xf32>
    %c1_63 = arith.constant 1 : index
    %c2_64 = arith.constant 2 : index
    %c0_65 = arith.constant 0 : index
    %c0_66 = arith.constant 0 : index
    %81 = vector.load %arg2[%c1_63, %c2_64, %c0_65, %c0_66] : memref<9x4x8x128xf32, #tpu.memory_space<vmem>>, vector<1x1x8x128xf32>
    %82 = vector.shape_cast %81 : vector<1x1x8x128xf32> to vector<8x128xf32>
    %c1_67 = arith.constant 1 : index
    %c3_68 = arith.constant 3 : index
    %c0_69 = arith.constant 0 : index
    %c0_70 = arith.constant 0 : index
    %83 = vector.load %arg2[%c1_67, %c3_68, %c0_69, %c0_70] : memref<9x4x8x128xf32, #tpu.memory_space<vmem>>, vector<1x1x8x128xf32>
    %84 = vector.shape_cast %83 : vector<1x1x8x128xf32> to vector<8x128xf32>
    %85 = arith.negf %78 : vector<8x128xf32>
    %86 = math.exp %85 : vector<8x128xf32>
    %cst_71 = arith.constant 1.000000e+00 : f32
    %87 = vector.broadcast %cst_71 : f32 to vector<8x128xf32>
    %88 = arith.addf %87, %86 : vector<8x128xf32>
    %89 = arith.divf %87, %88 : vector<8x128xf32>
    %90 = arith.negf %80 : vector<8x128xf32>
    %91 = math.exp %90 : vector<8x128xf32>
    %cst_72 = arith.constant 1.000000e+00 : f32
    %92 = vector.broadcast %cst_72 : f32 to vector<8x128xf32>
    %93 = arith.addf %92, %91 : vector<8x128xf32>
    %94 = arith.divf %92, %93 : vector<8x128xf32>
    %c1_73 = arith.constant 1 : index
    %c3_74 = arith.constant 3 : index
    %c0_75 = arith.constant 0 : index
    %c0_76 = arith.constant 0 : index
    %95 = vector.load %arg3[%c1_73, %c3_74, %c0_75, %c0_76] : memref<9x5x8x128xf32, #tpu.memory_space<vmem>>, vector<1x1x8x128xf32>
    %96 = vector.shape_cast %95 : vector<1x1x8x128xf32> to vector<8x128xf32>
    %c1_77 = arith.constant 1 : index
    %c4_78 = arith.constant 4 : index
    %c0_79 = arith.constant 0 : index
    %c0_80 = arith.constant 0 : index
    %97 = vector.load %arg3[%c1_77, %c4_78, %c0_79, %c0_80] : memref<9x5x8x128xf32, #tpu.memory_space<vmem>>, vector<1x1x8x128xf32>
    %98 = vector.shape_cast %97 : vector<1x1x8x128xf32> to vector<8x128xf32>
    %99 = arith.subf %89, %72 : vector<8x128xf32>
    %100 = arith.mulf %99, %99 : vector<8x128xf32>
    %101 = arith.subf %94, %74 : vector<8x128xf32>
    %102 = arith.mulf %101, %101 : vector<8x128xf32>
    %103 = arith.addf %100, %102 : vector<8x128xf32>
    %104 = arith.subf %82, %96 : vector<8x128xf32>
    %105 = arith.mulf %104, %104 : vector<8x128xf32>
    %106 = arith.addf %103, %105 : vector<8x128xf32>
    %107 = arith.subf %84, %98 : vector<8x128xf32>
    %108 = arith.mulf %107, %107 : vector<8x128xf32>
    %109 = arith.addf %106, %108 : vector<8x128xf32>
    %cst_81 = arith.constant 0.000000e+00 : f32
    %110 = vector.broadcast %cst_81 : f32 to vector<8x128xf32>
    %111 = arith.select %76, %109, %110 : vector<8x128xi1>, vector<8x128xf32>
    %cst_82 = arith.constant dense<0.000000e+00> : vector<128xf32>
    %112 = vector.multi_reduction <add>, %111, %cst_82 [0] : vector<8x128xf32> to vector<128xf32>
    %113 = vector.shape_cast %112 : vector<128xf32> to vector<1x128xf32>
    %114 = arith.extui %76 : vector<8x128xi1> to vector<8x128xi32>
    %115 = arith.sitofp %114 : vector<8x128xi32> to vector<8x128xf32>
    %cst_83 = arith.constant dense<0.000000e+00> : vector<128xf32>
    %116 = vector.multi_reduction <add>, %115, %cst_83 [0] : vector<8x128xf32> to vector<128xf32>
    %117 = vector.shape_cast %116 : vector<128xf32> to vector<1x128xf32>
    %c0_i32_84 = arith.constant 0 : i32
    %118 = vector.broadcast %c0_i32_84 : i32 to vector<8x128xi32>
    %119 = arith.cmpi eq, %0, %118 : vector<8x128xi32>
    %cst_85 = arith.constant 0.000000e+00 : f32
    %120 = vector.shape_cast %113 : vector<1x128xf32> to vector<1x128xf32>
    %121 = vector.broadcast %120 : vector<1x128xf32> to vector<8x128xf32>
    %122 = vector.broadcast %cst_85 : f32 to vector<8x128xf32>
    %123 = arith.select %119, %121, %122 : vector<8x128xi1>, vector<8x128xf32>
    %c1_i32_86 = arith.constant 1 : i32
    %124 = vector.broadcast %c1_i32_86 : i32 to vector<8x128xi32>
    %125 = arith.cmpi eq, %0, %124 : vector<8x128xi32>
    %cst_87 = arith.constant 0.000000e+00 : f32
    %126 = vector.shape_cast %117 : vector<1x128xf32> to vector<1x128xf32>
    %127 = vector.broadcast %126 : vector<1x128xf32> to vector<8x128xf32>
    %128 = vector.broadcast %cst_87 : f32 to vector<8x128xf32>
    %129 = arith.select %125, %127, %128 : vector<8x128xi1>, vector<8x128xf32>
    %130 = arith.addf %123, %129 : vector<8x128xf32>
    %c0_i32_88 = arith.constant 0 : i32
    %131 = arith.cmpi eq, %arg1, %c0_i32_88 : i32
    %132 = arith.extui %131 : i1 to i32
    %c0_i32_89 = arith.constant 0 : i32
    %133 = arith.cmpi ne, %132, %c0_i32_89 : i32
    scf.if %133 {
      %c1_438 = arith.constant 1 : index
      %c0_439 = arith.constant 0 : index
      %c0_440 = arith.constant 0 : index
      %613 = vector.load %arg4[%c1_438, %c0_439, %c0_440] : memref<9x8x128xf32, #tpu.memory_space<vmem>>, vector<1x8x128xf32>
      %614 = vector.shape_cast %613 : vector<1x8x128xf32> to vector<8x128xf32>
      %615 = vector.shape_cast %130 : vector<8x128xf32> to vector<1x8x128xf32>
      tpu.vector_store %arg4[%c1_438, %c0_439, %c0_440], %615 {strides = array<i32>} : memref<9x8x128xf32, #tpu.memory_space<vmem>>, vector<1x8x128xf32>,
    } else {
    }
    %c0_i32_90 = arith.constant 0 : i32
    %134 = arith.cmpi ne, %arg1, %c0_i32_90 : i32
    %135 = arith.extui %134 : i1 to i32
    %c0_i32_91 = arith.constant 0 : i32
    %136 = arith.cmpi ne, %135, %c0_i32_91 : i32
    scf.if %136 {
      %c1_438 = arith.constant 1 : index
      %c0_439 = arith.constant 0 : index
      %c0_440 = arith.constant 0 : index
      %613 = vector.load %arg4[%c1_438, %c0_439, %c0_440] : memref<9x8x128xf32, #tpu.memory_space<vmem>>, vector<1x8x128xf32>
      %614 = vector.shape_cast %613 : vector<1x8x128xf32> to vector<8x128xf32>
      %615 = arith.addf %614, %130 : vector<8x128xf32>
      %c1_441 = arith.constant 1 : index
      %c0_442 = arith.constant 0 : index
      %c0_443 = arith.constant 0 : index
      %616 = vector.load %arg4[%c1_441, %c0_442, %c0_443] : memref<9x8x128xf32, #tpu.memory_space<vmem>>, vector<1x8x128xf32>
      %617 = vector.shape_cast %616 : vector<1x8x128xf32> to vector<8x128xf32>
      %618 = vector.shape_cast %615 : vector<8x128xf32> to vector<1x8x128xf32>
      tpu.vector_store %arg4[%c1_441, %c0_442, %c0_443], %618 {strides = array<i32>} : memref<9x8x128xf32, #tpu.memory_space<vmem>>, vector<1x8x128xf32>,
    } else {
    }
    %c2_92 = arith.constant 2 : index
    %c0_93 = arith.constant 0 : index
    %c0_94 = arith.constant 0 : index
    %c0_95 = arith.constant 0 : index
    %137 = vector.load %arg3[%c2_92, %c0_93, %c0_94, %c0_95] : memref<9x5x8x128xf32, #tpu.memory_space<vmem>>, vector<1x1x8x128xf32>
    %138 = vector.shape_cast %137 : vector<1x1x8x128xf32> to vector<8x128xf32>
    %c2_96 = arith.constant 2 : index
    %c1_97 = arith.constant 1 : index
    %c0_98 = arith.constant 0 : index
    %c0_99 = arith.constant 0 : index
    %139 = vector.load %arg3[%c2_96, %c1_97, %c0_98, %c0_99] : memref<9x5x8x128xf32, #tpu.memory_space<vmem>>, vector<1x1x8x128xf32>
    %140 = vector.shape_cast %139 : vector<1x1x8x128xf32> to vector<8x128xf32>
    %c2_100 = arith.constant 2 : index
    %c2_101 = arith.constant 2 : index
    %c0_102 = arith.constant 0 : index
    %c0_103 = arith.constant 0 : index
    %141 = vector.load %arg3[%c2_100, %c2_101, %c0_102, %c0_103] : memref<9x5x8x128xf32, #tpu.memory_space<vmem>>, vector<1x1x8x128xf32>
    %142 = vector.shape_cast %141 : vector<1x1x8x128xf32> to vector<8x128xf32>
    %cst_104 = arith.constant 1.000000e+00 : f32
    %143 = vector.broadcast %cst_104 : f32 to vector<8x128xf32>
    %144 = arith.cmpf oeq, %138, %143 : vector<8x128xf32>
    %c2_105 = arith.constant 2 : index
    %c0_106 = arith.constant 0 : index
    %c0_107 = arith.constant 0 : index
    %c0_108 = arith.constant 0 : index
    %145 = vector.load %arg2[%c2_105, %c0_106, %c0_107, %c0_108] : memref<9x4x8x128xf32, #tpu.memory_space<vmem>>, vector<1x1x8x128xf32>
    %146 = vector.shape_cast %145 : vector<1x1x8x128xf32> to vector<8x128xf32>
    %c2_109 = arith.constant 2 : index
    %c1_110 = arith.constant 1 : index
    %c0_111 = arith.constant 0 : index
    %c0_112 = arith.constant 0 : index
    %147 = vector.load %arg2[%c2_109, %c1_110, %c0_111, %c0_112] : memref<9x4x8x128xf32, #tpu.memory_space<vmem>>, vector<1x1x8x128xf32>
    %148 = vector.shape_cast %147 : vector<1x1x8x128xf32> to vector<8x128xf32>
    %c2_113 = arith.constant 2 : index
    %c2_114 = arith.constant 2 : index
    %c0_115 = arith.constant 0 : index
    %c0_116 = arith.constant 0 : index
    %149 = vector.load %arg2[%c2_113, %c2_114, %c0_115, %c0_116] : memref<9x4x8x128xf32, #tpu.memory_space<vmem>>, vector<1x1x8x128xf32>
    %150 = vector.shape_cast %149 : vector<1x1x8x128xf32> to vector<8x128xf32>
    %c2_117 = arith.constant 2 : index
    %c3_118 = arith.constant 3 : index
    %c0_119 = arith.constant 0 : index
    %c0_120 = arith.constant 0 : index
    %151 = vector.load %arg2[%c2_117, %c3_118, %c0_119, %c0_120] : memref<9x4x8x128xf32, #tpu.memory_space<vmem>>, vector<1x1x8x128xf32>
    %152 = vector.shape_cast %151 : vector<1x1x8x128xf32> to vector<8x128xf32>
    %153 = arith.negf %146 : vector<8x128xf32>
    %154 = math.exp %153 : vector<8x128xf32>
    %cst_121 = arith.constant 1.000000e+00 : f32
    %155 = vector.broadcast %cst_121 : f32 to vector<8x128xf32>
    %156 = arith.addf %155, %154 : vector<8x128xf32>
    %157 = arith.divf %155, %156 : vector<8x128xf32>
    %158 = arith.negf %148 : vector<8x128xf32>
    %159 = math.exp %158 : vector<8x128xf32>
    %cst_122 = arith.constant 1.000000e+00 : f32
    %160 = vector.broadcast %cst_122 : f32 to vector<8x128xf32>
    %161 = arith.addf %160, %159 : vector<8x128xf32>
    %162 = arith.divf %160, %161 : vector<8x128xf32>
    %c2_123 = arith.constant 2 : index
    %c3_124 = arith.constant 3 : index
    %c0_125 = arith.constant 0 : index
    %c0_126 = arith.constant 0 : index
    %163 = vector.load %arg3[%c2_123, %c3_124, %c0_125, %c0_126] : memref<9x5x8x128xf32, #tpu.memory_space<vmem>>, vector<1x1x8x128xf32>
    %164 = vector.shape_cast %163 : vector<1x1x8x128xf32> to vector<8x128xf32>
    %c2_127 = arith.constant 2 : index
    %c4_128 = arith.constant 4 : index
    %c0_129 = arith.constant 0 : index
    %c0_130 = arith.constant 0 : index
    %165 = vector.load %arg3[%c2_127, %c4_128, %c0_129, %c0_130] : memref<9x5x8x128xf32, #tpu.memory_space<vmem>>, vector<1x1x8x128xf32>
    %166 = vector.shape_cast %165 : vector<1x1x8x128xf32> to vector<8x128xf32>
    %167 = arith.subf %157, %140 : vector<8x128xf32>
    %168 = arith.mulf %167, %167 : vector<8x128xf32>
    %169 = arith.subf %162, %142 : vector<8x128xf32>
    %170 = arith.mulf %169, %169 : vector<8x128xf32>
    %171 = arith.addf %168, %170 : vector<8x128xf32>
    %172 = arith.subf %150, %164 : vector<8x128xf32>
    %173 = arith.mulf %172, %172 : vector<8x128xf32>
    %174 = arith.addf %171, %173 : vector<8x128xf32>
    %175 = arith.subf %152, %166 : vector<8x128xf32>
    %176 = arith.mulf %175, %175 : vector<8x128xf32>
    %177 = arith.addf %174, %176 : vector<8x128xf32>
    %cst_131 = arith.constant 0.000000e+00 : f32
    %178 = vector.broadcast %cst_131 : f32 to vector<8x128xf32>
    %179 = arith.select %144, %177, %178 : vector<8x128xi1>, vector<8x128xf32>
    %cst_132 = arith.constant dense<0.000000e+00> : vector<128xf32>
    %180 = vector.multi_reduction <add>, %179, %cst_132 [0] : vector<8x128xf32> to vector<128xf32>
    %181 = vector.shape_cast %180 : vector<128xf32> to vector<1x128xf32>
    %182 = arith.extui %144 : vector<8x128xi1> to vector<8x128xi32>
    %183 = arith.sitofp %182 : vector<8x128xi32> to vector<8x128xf32>
    %cst_133 = arith.constant dense<0.000000e+00> : vector<128xf32>
    %184 = vector.multi_reduction <add>, %183, %cst_133 [0] : vector<8x128xf32> to vector<128xf32>
    %185 = vector.shape_cast %184 : vector<128xf32> to vector<1x128xf32>
    %c0_i32_134 = arith.constant 0 : i32
    %186 = vector.broadcast %c0_i32_134 : i32 to vector<8x128xi32>
    %187 = arith.cmpi eq, %0, %186 : vector<8x128xi32>
    %cst_135 = arith.constant 0.000000e+00 : f32
    %188 = vector.shape_cast %181 : vector<1x128xf32> to vector<1x128xf32>
    %189 = vector.broadcast %188 : vector<1x128xf32> to vector<8x128xf32>
    %190 = vector.broadcast %cst_135 : f32 to vector<8x128xf32>
    %191 = arith.select %187, %189, %190 : vector<8x128xi1>, vector<8x128xf32>
    %c1_i32_136 = arith.constant 1 : i32
    %192 = vector.broadcast %c1_i32_136 : i32 to vector<8x128xi32>
    %193 = arith.cmpi eq, %0, %192 : vector<8x128xi32>
    %cst_137 = arith.constant 0.000000e+00 : f32
    %194 = vector.shape_cast %185 : vector<1x128xf32> to vector<1x128xf32>
    %195 = vector.broadcast %194 : vector<1x128xf32> to vector<8x128xf32>
    %196 = vector.broadcast %cst_137 : f32 to vector<8x128xf32>
    %197 = arith.select %193, %195, %196 : vector<8x128xi1>, vector<8x128xf32>
    %198 = arith.addf %191, %197 : vector<8x128xf32>
    %c0_i32_138 = arith.constant 0 : i32
    %199 = arith.cmpi eq, %arg1, %c0_i32_138 : i32
    %200 = arith.extui %199 : i1 to i32
    %c0_i32_139 = arith.constant 0 : i32
    %201 = arith.cmpi ne, %200, %c0_i32_139 : i32
    scf.if %201 {
      %c2_438 = arith.constant 2 : index
      %c0_439 = arith.constant 0 : index
      %c0_440 = arith.constant 0 : index
      %613 = vector.load %arg4[%c2_438, %c0_439, %c0_440] : memref<9x8x128xf32, #tpu.memory_space<vmem>>, vector<1x8x128xf32>
      %614 = vector.shape_cast %613 : vector<1x8x128xf32> to vector<8x128xf32>
      %615 = vector.shape_cast %198 : vector<8x128xf32> to vector<1x8x128xf32>
      tpu.vector_store %arg4[%c2_438, %c0_439, %c0_440], %615 {strides = array<i32>} : memref<9x8x128xf32, #tpu.memory_space<vmem>>, vector<1x8x128xf32>,
    } else {
    }
    %c0_i32_140 = arith.constant 0 : i32
    %202 = arith.cmpi ne, %arg1, %c0_i32_140 : i32
    %203 = arith.extui %202 : i1 to i32
    %c0_i32_141 = arith.constant 0 : i32
    %204 = arith.cmpi ne, %203, %c0_i32_141 : i32
    scf.if %204 {
      %c2_438 = arith.constant 2 : index
      %c0_439 = arith.constant 0 : index
      %c0_440 = arith.constant 0 : index
      %613 = vector.load %arg4[%c2_438, %c0_439, %c0_440] : memref<9x8x128xf32, #tpu.memory_space<vmem>>, vector<1x8x128xf32>
      %614 = vector.shape_cast %613 : vector<1x8x128xf32> to vector<8x128xf32>
      %615 = arith.addf %614, %198 : vector<8x128xf32>
      %c2_441 = arith.constant 2 : index
      %c0_442 = arith.constant 0 : index
      %c0_443 = arith.constant 0 : index
      %616 = vector.load %arg4[%c2_441, %c0_442, %c0_443] : memref<9x8x128xf32, #tpu.memory_space<vmem>>, vector<1x8x128xf32>
      %617 = vector.shape_cast %616 : vector<1x8x128xf32> to vector<8x128xf32>
      %618 = vector.shape_cast %615 : vector<8x128xf32> to vector<1x8x128xf32>
      tpu.vector_store %arg4[%c2_441, %c0_442, %c0_443], %618 {strides = array<i32>} : memref<9x8x128xf32, #tpu.memory_space<vmem>>, vector<1x8x128xf32>,
    } else {
    }
    %c3_142 = arith.constant 3 : index
    %c0_143 = arith.constant 0 : index
    %c0_144 = arith.constant 0 : index
    %c0_145 = arith.constant 0 : index
    %205 = vector.load %arg3[%c3_142, %c0_143, %c0_144, %c0_145] : memref<9x5x8x128xf32, #tpu.memory_space<vmem>>, vector<1x1x8x128xf32>
    %206 = vector.shape_cast %205 : vector<1x1x8x128xf32> to vector<8x128xf32>
    %c3_146 = arith.constant 3 : index
    %c1_147 = arith.constant 1 : index
    %c0_148 = arith.constant 0 : index
    %c0_149 = arith.constant 0 : index
    %207 = vector.load %arg3[%c3_146, %c1_147, %c0_148, %c0_149] : memref<9x5x8x128xf32, #tpu.memory_space<vmem>>, vector<1x1x8x128xf32>
    %208 = vector.shape_cast %207 : vector<1x1x8x128xf32> to vector<8x128xf32>
    %c3_150 = arith.constant 3 : index
    %c2_151 = arith.constant 2 : index
    %c0_152 = arith.constant 0 : index
    %c0_153 = arith.constant 0 : index
    %209 = vector.load %arg3[%c3_150, %c2_151, %c0_152, %c0_153] : memref<9x5x8x128xf32, #tpu.memory_space<vmem>>, vector<1x1x8x128xf32>
    %210 = vector.shape_cast %209 : vector<1x1x8x128xf32> to vector<8x128xf32>
    %cst_154 = arith.constant 1.000000e+00 : f32
    %211 = vector.broadcast %cst_154 : f32 to vector<8x128xf32>
    %212 = arith.cmpf oeq, %206, %211 : vector<8x128xf32>
    %c3_155 = arith.constant 3 : index
    %c0_156 = arith.constant 0 : index
    %c0_157 = arith.constant 0 : index
    %c0_158 = arith.constant 0 : index
    %213 = vector.load %arg2[%c3_155, %c0_156, %c0_157, %c0_158] : memref<9x4x8x128xf32, #tpu.memory_space<vmem>>, vector<1x1x8x128xf32>
    %214 = vector.shape_cast %213 : vector<1x1x8x128xf32> to vector<8x128xf32>
    %c3_159 = arith.constant 3 : index
    %c1_160 = arith.constant 1 : index
    %c0_161 = arith.constant 0 : index
    %c0_162 = arith.constant 0 : index
    %215 = vector.load %arg2[%c3_159, %c1_160, %c0_161, %c0_162] : memref<9x4x8x128xf32, #tpu.memory_space<vmem>>, vector<1x1x8x128xf32>
    %216 = vector.shape_cast %215 : vector<1x1x8x128xf32> to vector<8x128xf32>
    %c3_163 = arith.constant 3 : index
    %c2_164 = arith.constant 2 : index
    %c0_165 = arith.constant 0 : index
    %c0_166 = arith.constant 0 : index
    %217 = vector.load %arg2[%c3_163, %c2_164, %c0_165, %c0_166] : memref<9x4x8x128xf32, #tpu.memory_space<vmem>>, vector<1x1x8x128xf32>
    %218 = vector.shape_cast %217 : vector<1x1x8x128xf32> to vector<8x128xf32>
    %c3_167 = arith.constant 3 : index
    %c3_168 = arith.constant 3 : index
    %c0_169 = arith.constant 0 : index
    %c0_170 = arith.constant 0 : index
    %219 = vector.load %arg2[%c3_167, %c3_168, %c0_169, %c0_170] : memref<9x4x8x128xf32, #tpu.memory_space<vmem>>, vector<1x1x8x128xf32>
    %220 = vector.shape_cast %219 : vector<1x1x8x128xf32> to vector<8x128xf32>
    %221 = arith.negf %214 : vector<8x128xf32>
    %222 = math.exp %221 : vector<8x128xf32>
    %cst_171 = arith.constant 1.000000e+00 : f32
    %223 = vector.broadcast %cst_171 : f32 to vector<8x128xf32>
    %224 = arith.addf %223, %222 : vector<8x128xf32>
    %225 = arith.divf %223, %224 : vector<8x128xf32>
    %226 = arith.negf %216 : vector<8x128xf32>
    %227 = math.exp %226 : vector<8x128xf32>
    %cst_172 = arith.constant 1.000000e+00 : f32
    %228 = vector.broadcast %cst_172 : f32 to vector<8x128xf32>
    %229 = arith.addf %228, %227 : vector<8x128xf32>
    %230 = arith.divf %228, %229 : vector<8x128xf32>
    %c3_173 = arith.constant 3 : index
    %c3_174 = arith.constant 3 : index
    %c0_175 = arith.constant 0 : index
    %c0_176 = arith.constant 0 : index
    %231 = vector.load %arg3[%c3_173, %c3_174, %c0_175, %c0_176] : memref<9x5x8x128xf32, #tpu.memory_space<vmem>>, vector<1x1x8x128xf32>
    %232 = vector.shape_cast %231 : vector<1x1x8x128xf32> to vector<8x128xf32>
    %c3_177 = arith.constant 3 : index
    %c4_178 = arith.constant 4 : index
    %c0_179 = arith.constant 0 : index
    %c0_180 = arith.constant 0 : index
    %233 = vector.load %arg3[%c3_177, %c4_178, %c0_179, %c0_180] : memref<9x5x8x128xf32, #tpu.memory_space<vmem>>, vector<1x1x8x128xf32>
    %234 = vector.shape_cast %233 : vector<1x1x8x128xf32> to vector<8x128xf32>
    %235 = arith.subf %225, %208 : vector<8x128xf32>
    %236 = arith.mulf %235, %235 : vector<8x128xf32>
    %237 = arith.subf %230, %210 : vector<8x128xf32>
    %238 = arith.mulf %237, %237 : vector<8x128xf32>
    %239 = arith.addf %236, %238 : vector<8x128xf32>
    %240 = arith.subf %218, %232 : vector<8x128xf32>
    %241 = arith.mulf %240, %240 : vector<8x128xf32>
    %242 = arith.addf %239, %241 : vector<8x128xf32>
    %243 = arith.subf %220, %234 : vector<8x128xf32>
    %244 = arith.mulf %243, %243 : vector<8x128xf32>
    %245 = arith.addf %242, %244 : vector<8x128xf32>
    %cst_181 = arith.constant 0.000000e+00 : f32
    %246 = vector.broadcast %cst_181 : f32 to vector<8x128xf32>
    %247 = arith.select %212, %245, %246 : vector<8x128xi1>, vector<8x128xf32>
    %cst_182 = arith.constant dense<0.000000e+00> : vector<128xf32>
    %248 = vector.multi_reduction <add>, %247, %cst_182 [0] : vector<8x128xf32> to vector<128xf32>
    %249 = vector.shape_cast %248 : vector<128xf32> to vector<1x128xf32>
    %250 = arith.extui %212 : vector<8x128xi1> to vector<8x128xi32>
    %251 = arith.sitofp %250 : vector<8x128xi32> to vector<8x128xf32>
    %cst_183 = arith.constant dense<0.000000e+00> : vector<128xf32>
    %252 = vector.multi_reduction <add>, %251, %cst_183 [0] : vector<8x128xf32> to vector<128xf32>
    %253 = vector.shape_cast %252 : vector<128xf32> to vector<1x128xf32>
    %c0_i32_184 = arith.constant 0 : i32
    %254 = vector.broadcast %c0_i32_184 : i32 to vector<8x128xi32>
    %255 = arith.cmpi eq, %0, %254 : vector<8x128xi32>
    %cst_185 = arith.constant 0.000000e+00 : f32
    %256 = vector.shape_cast %249 : vector<1x128xf32> to vector<1x128xf32>
    %257 = vector.broadcast %256 : vector<1x128xf32> to vector<8x128xf32>
    %258 = vector.broadcast %cst_185 : f32 to vector<8x128xf32>
    %259 = arith.select %255, %257, %258 : vector<8x128xi1>, vector<8x128xf32>
    %c1_i32_186 = arith.constant 1 : i32
    %260 = vector.broadcast %c1_i32_186 : i32 to vector<8x128xi32>
    %261 = arith.cmpi eq, %0, %260 : vector<8x128xi32>
    %cst_187 = arith.constant 0.000000e+00 : f32
    %262 = vector.shape_cast %253 : vector<1x128xf32> to vector<1x128xf32>
    %263 = vector.broadcast %262 : vector<1x128xf32> to vector<8x128xf32>
    %264 = vector.broadcast %cst_187 : f32 to vector<8x128xf32>
    %265 = arith.select %261, %263, %264 : vector<8x128xi1>, vector<8x128xf32>
    %266 = arith.addf %259, %265 : vector<8x128xf32>
    %c0_i32_188 = arith.constant 0 : i32
    %267 = arith.cmpi eq, %arg1, %c0_i32_188 : i32
    %268 = arith.extui %267 : i1 to i32
    %c0_i32_189 = arith.constant 0 : i32
    %269 = arith.cmpi ne, %268, %c0_i32_189 : i32
    scf.if %269 {
      %c3_438 = arith.constant 3 : index
      %c0_439 = arith.constant 0 : index
      %c0_440 = arith.constant 0 : index
      %613 = vector.load %arg4[%c3_438, %c0_439, %c0_440] : memref<9x8x128xf32, #tpu.memory_space<vmem>>, vector<1x8x128xf32>
      %614 = vector.shape_cast %613 : vector<1x8x128xf32> to vector<8x128xf32>
      %615 = vector.shape_cast %266 : vector<8x128xf32> to vector<1x8x128xf32>
      tpu.vector_store %arg4[%c3_438, %c0_439, %c0_440], %615 {strides = array<i32>} : memref<9x8x128xf32, #tpu.memory_space<vmem>>, vector<1x8x128xf32>,
    } else {
    }
    %c0_i32_190 = arith.constant 0 : i32
    %270 = arith.cmpi ne, %arg1, %c0_i32_190 : i32
    %271 = arith.extui %270 : i1 to i32
    %c0_i32_191 = arith.constant 0 : i32
    %272 = arith.cmpi ne, %271, %c0_i32_191 : i32
    scf.if %272 {
      %c3_438 = arith.constant 3 : index
      %c0_439 = arith.constant 0 : index
      %c0_440 = arith.constant 0 : index
      %613 = vector.load %arg4[%c3_438, %c0_439, %c0_440] : memref<9x8x128xf32, #tpu.memory_space<vmem>>, vector<1x8x128xf32>
      %614 = vector.shape_cast %613 : vector<1x8x128xf32> to vector<8x128xf32>
      %615 = arith.addf %614, %266 : vector<8x128xf32>
      %c3_441 = arith.constant 3 : index
      %c0_442 = arith.constant 0 : index
      %c0_443 = arith.constant 0 : index
      %616 = vector.load %arg4[%c3_441, %c0_442, %c0_443] : memref<9x8x128xf32, #tpu.memory_space<vmem>>, vector<1x8x128xf32>
      %617 = vector.shape_cast %616 : vector<1x8x128xf32> to vector<8x128xf32>
      %618 = vector.shape_cast %615 : vector<8x128xf32> to vector<1x8x128xf32>
      tpu.vector_store %arg4[%c3_441, %c0_442, %c0_443], %618 {strides = array<i32>} : memref<9x8x128xf32, #tpu.memory_space<vmem>>, vector<1x8x128xf32>,
    } else {
    }
    %c4_192 = arith.constant 4 : index
    %c0_193 = arith.constant 0 : index
    %c0_194 = arith.constant 0 : index
    %c0_195 = arith.constant 0 : index
    %273 = vector.load %arg3[%c4_192, %c0_193, %c0_194, %c0_195] : memref<9x5x8x128xf32, #tpu.memory_space<vmem>>, vector<1x1x8x128xf32>
    %274 = vector.shape_cast %273 : vector<1x1x8x128xf32> to vector<8x128xf32>
    %c4_196 = arith.constant 4 : index
    %c1_197 = arith.constant 1 : index
    %c0_198 = arith.constant 0 : index
    %c0_199 = arith.constant 0 : index
    %275 = vector.load %arg3[%c4_196, %c1_197, %c0_198, %c0_199] : memref<9x5x8x128xf32, #tpu.memory_space<vmem>>, vector<1x1x8x128xf32>
    %276 = vector.shape_cast %275 : vector<1x1x8x128xf32> to vector<8x128xf32>
    %c4_200 = arith.constant 4 : index
    %c2_201 = arith.constant 2 : index
    %c0_202 = arith.constant 0 : index
    %c0_203 = arith.constant 0 : index
    %277 = vector.load %arg3[%c4_200, %c2_201, %c0_202, %c0_203] : memref<9x5x8x128xf32, #tpu.memory_space<vmem>>, vector<1x1x8x128xf32>
    %278 = vector.shape_cast %277 : vector<1x1x8x128xf32> to vector<8x128xf32>
    %cst_204 = arith.constant 1.000000e+00 : f32
    %279 = vector.broadcast %cst_204 : f32 to vector<8x128xf32>
    %280 = arith.cmpf oeq, %274, %279 : vector<8x128xf32>
    %c4_205 = arith.constant 4 : index
    %c0_206 = arith.constant 0 : index
    %c0_207 = arith.constant 0 : index
    %c0_208 = arith.constant 0 : index
    %281 = vector.load %arg2[%c4_205, %c0_206, %c0_207, %c0_208] : memref<9x4x8x128xf32, #tpu.memory_space<vmem>>, vector<1x1x8x128xf32>
    %282 = vector.shape_cast %281 : vector<1x1x8x128xf32> to vector<8x128xf32>
    %c4_209 = arith.constant 4 : index
    %c1_210 = arith.constant 1 : index
    %c0_211 = arith.constant 0 : index
    %c0_212 = arith.constant 0 : index
    %283 = vector.load %arg2[%c4_209, %c1_210, %c0_211, %c0_212] : memref<9x4x8x128xf32, #tpu.memory_space<vmem>>, vector<1x1x8x128xf32>
    %284 = vector.shape_cast %283 : vector<1x1x8x128xf32> to vector<8x128xf32>
    %c4_213 = arith.constant 4 : index
    %c2_214 = arith.constant 2 : index
    %c0_215 = arith.constant 0 : index
    %c0_216 = arith.constant 0 : index
    %285 = vector.load %arg2[%c4_213, %c2_214, %c0_215, %c0_216] : memref<9x4x8x128xf32, #tpu.memory_space<vmem>>, vector<1x1x8x128xf32>
    %286 = vector.shape_cast %285 : vector<1x1x8x128xf32> to vector<8x128xf32>
    %c4_217 = arith.constant 4 : index
    %c3_218 = arith.constant 3 : index
    %c0_219 = arith.constant 0 : index
    %c0_220 = arith.constant 0 : index
    %287 = vector.load %arg2[%c4_217, %c3_218, %c0_219, %c0_220] : memref<9x4x8x128xf32, #tpu.memory_space<vmem>>, vector<1x1x8x128xf32>
    %288 = vector.shape_cast %287 : vector<1x1x8x128xf32> to vector<8x128xf32>
    %289 = arith.negf %282 : vector<8x128xf32>
    %290 = math.exp %289 : vector<8x128xf32>
    %cst_221 = arith.constant 1.000000e+00 : f32
    %291 = vector.broadcast %cst_221 : f32 to vector<8x128xf32>
    %292 = arith.addf %291, %290 : vector<8x128xf32>
    %293 = arith.divf %291, %292 : vector<8x128xf32>
    %294 = arith.negf %284 : vector<8x128xf32>
    %295 = math.exp %294 : vector<8x128xf32>
    %cst_222 = arith.constant 1.000000e+00 : f32
    %296 = vector.broadcast %cst_222 : f32 to vector<8x128xf32>
    %297 = arith.addf %296, %295 : vector<8x128xf32>
    %298 = arith.divf %296, %297 : vector<8x128xf32>
    %c4_223 = arith.constant 4 : index
    %c3_224 = arith.constant 3 : index
    %c0_225 = arith.constant 0 : index
    %c0_226 = arith.constant 0 : index
    %299 = vector.load %arg3[%c4_223, %c3_224, %c0_225, %c0_226] : memref<9x5x8x128xf32, #tpu.memory_space<vmem>>, vector<1x1x8x128xf32>
    %300 = vector.shape_cast %299 : vector<1x1x8x128xf32> to vector<8x128xf32>
    %c4_227 = arith.constant 4 : index
    %c4_228 = arith.constant 4 : index
    %c0_229 = arith.constant 0 : index
    %c0_230 = arith.constant 0 : index
    %301 = vector.load %arg3[%c4_227, %c4_228, %c0_229, %c0_230] : memref<9x5x8x128xf32, #tpu.memory_space<vmem>>, vector<1x1x8x128xf32>
    %302 = vector.shape_cast %301 : vector<1x1x8x128xf32> to vector<8x128xf32>
    %303 = arith.subf %293, %276 : vector<8x128xf32>
    %304 = arith.mulf %303, %303 : vector<8x128xf32>
    %305 = arith.subf %298, %278 : vector<8x128xf32>
    %306 = arith.mulf %305, %305 : vector<8x128xf32>
    %307 = arith.addf %304, %306 : vector<8x128xf32>
    %308 = arith.subf %286, %300 : vector<8x128xf32>
    %309 = arith.mulf %308, %308 : vector<8x128xf32>
    %310 = arith.addf %307, %309 : vector<8x128xf32>
    %311 = arith.subf %288, %302 : vector<8x128xf32>
    %312 = arith.mulf %311, %311 : vector<8x128xf32>
    %313 = arith.addf %310, %312 : vector<8x128xf32>
    %cst_231 = arith.constant 0.000000e+00 : f32
    %314 = vector.broadcast %cst_231 : f32 to vector<8x128xf32>
    %315 = arith.select %280, %313, %314 : vector<8x128xi1>, vector<8x128xf32>
    %cst_232 = arith.constant dense<0.000000e+00> : vector<128xf32>
    %316 = vector.multi_reduction <add>, %315, %cst_232 [0] : vector<8x128xf32> to vector<128xf32>
    %317 = vector.shape_cast %316 : vector<128xf32> to vector<1x128xf32>
    %318 = arith.extui %280 : vector<8x128xi1> to vector<8x128xi32>
    %319 = arith.sitofp %318 : vector<8x128xi32> to vector<8x128xf32>
    %cst_233 = arith.constant dense<0.000000e+00> : vector<128xf32>
    %320 = vector.multi_reduction <add>, %319, %cst_233 [0] : vector<8x128xf32> to vector<128xf32>
    %321 = vector.shape_cast %320 : vector<128xf32> to vector<1x128xf32>
    %c0_i32_234 = arith.constant 0 : i32
    %322 = vector.broadcast %c0_i32_234 : i32 to vector<8x128xi32>
    %323 = arith.cmpi eq, %0, %322 : vector<8x128xi32>
    %cst_235 = arith.constant 0.000000e+00 : f32
    %324 = vector.shape_cast %317 : vector<1x128xf32> to vector<1x128xf32>
    %325 = vector.broadcast %324 : vector<1x128xf32> to vector<8x128xf32>
    %326 = vector.broadcast %cst_235 : f32 to vector<8x128xf32>
    %327 = arith.select %323, %325, %326 : vector<8x128xi1>, vector<8x128xf32>
    %c1_i32_236 = arith.constant 1 : i32
    %328 = vector.broadcast %c1_i32_236 : i32 to vector<8x128xi32>
    %329 = arith.cmpi eq, %0, %328 : vector<8x128xi32>
    %cst_237 = arith.constant 0.000000e+00 : f32
    %330 = vector.shape_cast %321 : vector<1x128xf32> to vector<1x128xf32>
    %331 = vector.broadcast %330 : vector<1x128xf32> to vector<8x128xf32>
    %332 = vector.broadcast %cst_237 : f32 to vector<8x128xf32>
    %333 = arith.select %329, %331, %332 : vector<8x128xi1>, vector<8x128xf32>
    %334 = arith.addf %327, %333 : vector<8x128xf32>
    %c0_i32_238 = arith.constant 0 : i32
    %335 = arith.cmpi eq, %arg1, %c0_i32_238 : i32
    %336 = arith.extui %335 : i1 to i32
    %c0_i32_239 = arith.constant 0 : i32
    %337 = arith.cmpi ne, %336, %c0_i32_239 : i32
    scf.if %337 {
      %c4_438 = arith.constant 4 : index
      %c0_439 = arith.constant 0 : index
      %c0_440 = arith.constant 0 : index
      %613 = vector.load %arg4[%c4_438, %c0_439, %c0_440] : memref<9x8x128xf32, #tpu.memory_space<vmem>>, vector<1x8x128xf32>
      %614 = vector.shape_cast %613 : vector<1x8x128xf32> to vector<8x128xf32>
      %615 = vector.shape_cast %334 : vector<8x128xf32> to vector<1x8x128xf32>
      tpu.vector_store %arg4[%c4_438, %c0_439, %c0_440], %615 {strides = array<i32>} : memref<9x8x128xf32, #tpu.memory_space<vmem>>, vector<1x8x128xf32>,
    } else {
    }
    %c0_i32_240 = arith.constant 0 : i32
    %338 = arith.cmpi ne, %arg1, %c0_i32_240 : i32
    %339 = arith.extui %338 : i1 to i32
    %c0_i32_241 = arith.constant 0 : i32
    %340 = arith.cmpi ne, %339, %c0_i32_241 : i32
    scf.if %340 {
      %c4_438 = arith.constant 4 : index
      %c0_439 = arith.constant 0 : index
      %c0_440 = arith.constant 0 : index
      %613 = vector.load %arg4[%c4_438, %c0_439, %c0_440] : memref<9x8x128xf32, #tpu.memory_space<vmem>>, vector<1x8x128xf32>
      %614 = vector.shape_cast %613 : vector<1x8x128xf32> to vector<8x128xf32>
      %615 = arith.addf %614, %334 : vector<8x128xf32>
      %c4_441 = arith.constant 4 : index
      %c0_442 = arith.constant 0 : index
      %c0_443 = arith.constant 0 : index
      %616 = vector.load %arg4[%c4_441, %c0_442, %c0_443] : memref<9x8x128xf32, #tpu.memory_space<vmem>>, vector<1x8x128xf32>
      %617 = vector.shape_cast %616 : vector<1x8x128xf32> to vector<8x128xf32>
      %618 = vector.shape_cast %615 : vector<8x128xf32> to vector<1x8x128xf32>
      tpu.vector_store %arg4[%c4_441, %c0_442, %c0_443], %618 {strides = array<i32>} : memref<9x8x128xf32, #tpu.memory_space<vmem>>, vector<1x8x128xf32>,
    } else {
    }
    %c5 = arith.constant 5 : index
    %c0_242 = arith.constant 0 : index
    %c0_243 = arith.constant 0 : index
    %c0_244 = arith.constant 0 : index
    %341 = vector.load %arg3[%c5, %c0_242, %c0_243, %c0_244] : memref<9x5x8x128xf32, #tpu.memory_space<vmem>>, vector<1x1x8x128xf32>
    %342 = vector.shape_cast %341 : vector<1x1x8x128xf32> to vector<8x128xf32>
    %c5_245 = arith.constant 5 : index
    %c1_246 = arith.constant 1 : index
    %c0_247 = arith.constant 0 : index
    %c0_248 = arith.constant 0 : index
    %343 = vector.load %arg3[%c5_245, %c1_246, %c0_247, %c0_248] : memref<9x5x8x128xf32, #tpu.memory_space<vmem>>, vector<1x1x8x128xf32>
    %344 = vector.shape_cast %343 : vector<1x1x8x128xf32> to vector<8x128xf32>
    %c5_249 = arith.constant 5 : index
    %c2_250 = arith.constant 2 : index
    %c0_251 = arith.constant 0 : index
    %c0_252 = arith.constant 0 : index
    %345 = vector.load %arg3[%c5_249, %c2_250, %c0_251, %c0_252] : memref<9x5x8x128xf32, #tpu.memory_space<vmem>>, vector<1x1x8x128xf32>
    %346 = vector.shape_cast %345 : vector<1x1x8x128xf32> to vector<8x128xf32>
    %cst_253 = arith.constant 1.000000e+00 : f32
    %347 = vector.broadcast %cst_253 : f32 to vector<8x128xf32>
    %348 = arith.cmpf oeq, %342, %347 : vector<8x128xf32>
    %c5_254 = arith.constant 5 : index
    %c0_255 = arith.constant 0 : index
    %c0_256 = arith.constant 0 : index
    %c0_257 = arith.constant 0 : index
    %349 = vector.load %arg2[%c5_254, %c0_255, %c0_256, %c0_257] : memref<9x4x8x128xf32, #tpu.memory_space<vmem>>, vector<1x1x8x128xf32>
    %350 = vector.shape_cast %349 : vector<1x1x8x128xf32> to vector<8x128xf32>
    %c5_258 = arith.constant 5 : index
    %c1_259 = arith.constant 1 : index
    %c0_260 = arith.constant 0 : index
    %c0_261 = arith.constant 0 : index
    %351 = vector.load %arg2[%c5_258, %c1_259, %c0_260, %c0_261] : memref<9x4x8x128xf32, #tpu.memory_space<vmem>>, vector<1x1x8x128xf32>
    %352 = vector.shape_cast %351 : vector<1x1x8x128xf32> to vector<8x128xf32>
    %c5_262 = arith.constant 5 : index
    %c2_263 = arith.constant 2 : index
    %c0_264 = arith.constant 0 : index
    %c0_265 = arith.constant 0 : index
    %353 = vector.load %arg2[%c5_262, %c2_263, %c0_264, %c0_265] : memref<9x4x8x128xf32, #tpu.memory_space<vmem>>, vector<1x1x8x128xf32>
    %354 = vector.shape_cast %353 : vector<1x1x8x128xf32> to vector<8x128xf32>
    %c5_266 = arith.constant 5 : index
    %c3_267 = arith.constant 3 : index
    %c0_268 = arith.constant 0 : index
    %c0_269 = arith.constant 0 : index
    %355 = vector.load %arg2[%c5_266, %c3_267, %c0_268, %c0_269] : memref<9x4x8x128xf32, #tpu.memory_space<vmem>>, vector<1x1x8x128xf32>
    %356 = vector.shape_cast %355 : vector<1x1x8x128xf32> to vector<8x128xf32>
    %357 = arith.negf %350 : vector<8x128xf32>
    %358 = math.exp %357 : vector<8x128xf32>
    %cst_270 = arith.constant 1.000000e+00 : f32
    %359 = vector.broadcast %cst_270 : f32 to vector<8x128xf32>
    %360 = arith.addf %359, %358 : vector<8x128xf32>
    %361 = arith.divf %359, %360 : vector<8x128xf32>
    %362 = arith.negf %352 : vector<8x128xf32>
    %363 = math.exp %362 : vector<8x128xf32>
    %cst_271 = arith.constant 1.000000e+00 : f32
    %364 = vector.broadcast %cst_271 : f32 to vector<8x128xf32>
    %365 = arith.addf %364, %363 : vector<8x128xf32>
    %366 = arith.divf %364, %365 : vector<8x128xf32>
    %c5_272 = arith.constant 5 : index
    %c3_273 = arith.constant 3 : index
    %c0_274 = arith.constant 0 : index
    %c0_275 = arith.constant 0 : index
    %367 = vector.load %arg3[%c5_272, %c3_273, %c0_274, %c0_275] : memref<9x5x8x128xf32, #tpu.memory_space<vmem>>, vector<1x1x8x128xf32>
    %368 = vector.shape_cast %367 : vector<1x1x8x128xf32> to vector<8x128xf32>
    %c5_276 = arith.constant 5 : index
    %c4_277 = arith.constant 4 : index
    %c0_278 = arith.constant 0 : index
    %c0_279 = arith.constant 0 : index
    %369 = vector.load %arg3[%c5_276, %c4_277, %c0_278, %c0_279] : memref<9x5x8x128xf32, #tpu.memory_space<vmem>>, vector<1x1x8x128xf32>
    %370 = vector.shape_cast %369 : vector<1x1x8x128xf32> to vector<8x128xf32>
    %371 = arith.subf %361, %344 : vector<8x128xf32>
    %372 = arith.mulf %371, %371 : vector<8x128xf32>
    %373 = arith.subf %366, %346 : vector<8x128xf32>
    %374 = arith.mulf %373, %373 : vector<8x128xf32>
    %375 = arith.addf %372, %374 : vector<8x128xf32>
    %376 = arith.subf %354, %368 : vector<8x128xf32>
    %377 = arith.mulf %376, %376 : vector<8x128xf32>
    %378 = arith.addf %375, %377 : vector<8x128xf32>
    %379 = arith.subf %356, %370 : vector<8x128xf32>
    %380 = arith.mulf %379, %379 : vector<8x128xf32>
    %381 = arith.addf %378, %380 : vector<8x128xf32>
    %cst_280 = arith.constant 0.000000e+00 : f32
    %382 = vector.broadcast %cst_280 : f32 to vector<8x128xf32>
    %383 = arith.select %348, %381, %382 : vector<8x128xi1>, vector<8x128xf32>
    %cst_281 = arith.constant dense<0.000000e+00> : vector<128xf32>
    %384 = vector.multi_reduction <add>, %383, %cst_281 [0] : vector<8x128xf32> to vector<128xf32>
    %385 = vector.shape_cast %384 : vector<128xf32> to vector<1x128xf32>
    %386 = arith.extui %348 : vector<8x128xi1> to vector<8x128xi32>
    %387 = arith.sitofp %386 : vector<8x128xi32> to vector<8x128xf32>
    %cst_282 = arith.constant dense<0.000000e+00> : vector<128xf32>
    %388 = vector.multi_reduction <add>, %387, %cst_282 [0] : vector<8x128xf32> to vector<128xf32>
    %389 = vector.shape_cast %388 : vector<128xf32> to vector<1x128xf32>
    %c0_i32_283 = arith.constant 0 : i32
    %390 = vector.broadcast %c0_i32_283 : i32 to vector<8x128xi32>
    %391 = arith.cmpi eq, %0, %390 : vector<8x128xi32>
    %cst_284 = arith.constant 0.000000e+00 : f32
    %392 = vector.shape_cast %385 : vector<1x128xf32> to vector<1x128xf32>
    %393 = vector.broadcast %392 : vector<1x128xf32> to vector<8x128xf32>
    %394 = vector.broadcast %cst_284 : f32 to vector<8x128xf32>
    %395 = arith.select %391, %393, %394 : vector<8x128xi1>, vector<8x128xf32>
    %c1_i32_285 = arith.constant 1 : i32
    %396 = vector.broadcast %c1_i32_285 : i32 to vector<8x128xi32>
    %397 = arith.cmpi eq, %0, %396 : vector<8x128xi32>
    %cst_286 = arith.constant 0.000000e+00 : f32
    %398 = vector.shape_cast %389 : vector<1x128xf32> to vector<1x128xf32>
    %399 = vector.broadcast %398 : vector<1x128xf32> to vector<8x128xf32>
    %400 = vector.broadcast %cst_286 : f32 to vector<8x128xf32>
    %401 = arith.select %397, %399, %400 : vector<8x128xi1>, vector<8x128xf32>
    %402 = arith.addf %395, %401 : vector<8x128xf32>
    %c0_i32_287 = arith.constant 0 : i32
    %403 = arith.cmpi eq, %arg1, %c0_i32_287 : i32
    %404 = arith.extui %403 : i1 to i32
    %c0_i32_288 = arith.constant 0 : i32
    %405 = arith.cmpi ne, %404, %c0_i32_288 : i32
    scf.if %405 {
      %c5_438 = arith.constant 5 : index
      %c0_439 = arith.constant 0 : index
      %c0_440 = arith.constant 0 : index
      %613 = vector.load %arg4[%c5_438, %c0_439, %c0_440] : memref<9x8x128xf32, #tpu.memory_space<vmem>>, vector<1x8x128xf32>
      %614 = vector.shape_cast %613 : vector<1x8x128xf32> to vector<8x128xf32>
      %615 = vector.shape_cast %402 : vector<8x128xf32> to vector<1x8x128xf32>
      tpu.vector_store %arg4[%c5_438, %c0_439, %c0_440], %615 {strides = array<i32>} : memref<9x8x128xf32, #tpu.memory_space<vmem>>, vector<1x8x128xf32>,
    } else {
    }
    %c0_i32_289 = arith.constant 0 : i32
    %406 = arith.cmpi ne, %arg1, %c0_i32_289 : i32
    %407 = arith.extui %406 : i1 to i32
    %c0_i32_290 = arith.constant 0 : i32
    %408 = arith.cmpi ne, %407, %c0_i32_290 : i32
    scf.if %408 {
      %c5_438 = arith.constant 5 : index
      %c0_439 = arith.constant 0 : index
      %c0_440 = arith.constant 0 : index
      %613 = vector.load %arg4[%c5_438, %c0_439, %c0_440] : memref<9x8x128xf32, #tpu.memory_space<vmem>>, vector<1x8x128xf32>
      %614 = vector.shape_cast %613 : vector<1x8x128xf32> to vector<8x128xf32>
      %615 = arith.addf %614, %402 : vector<8x128xf32>
      %c5_441 = arith.constant 5 : index
      %c0_442 = arith.constant 0 : index
      %c0_443 = arith.constant 0 : index
      %616 = vector.load %arg4[%c5_441, %c0_442, %c0_443] : memref<9x8x128xf32, #tpu.memory_space<vmem>>, vector<1x8x128xf32>
      %617 = vector.shape_cast %616 : vector<1x8x128xf32> to vector<8x128xf32>
      %618 = vector.shape_cast %615 : vector<8x128xf32> to vector<1x8x128xf32>
      tpu.vector_store %arg4[%c5_441, %c0_442, %c0_443], %618 {strides = array<i32>} : memref<9x8x128xf32, #tpu.memory_space<vmem>>, vector<1x8x128xf32>,
    } else {
    }
    %c6 = arith.constant 6 : index
    %c0_291 = arith.constant 0 : index
    %c0_292 = arith.constant 0 : index
    %c0_293 = arith.constant 0 : index
    %409 = vector.load %arg3[%c6, %c0_291, %c0_292, %c0_293] : memref<9x5x8x128xf32, #tpu.memory_space<vmem>>, vector<1x1x8x128xf32>
    %410 = vector.shape_cast %409 : vector<1x1x8x128xf32> to vector<8x128xf32>
    %c6_294 = arith.constant 6 : index
    %c1_295 = arith.constant 1 : index
    %c0_296 = arith.constant 0 : index
    %c0_297 = arith.constant 0 : index
    %411 = vector.load %arg3[%c6_294, %c1_295, %c0_296, %c0_297] : memref<9x5x8x128xf32, #tpu.memory_space<vmem>>, vector<1x1x8x128xf32>
    %412 = vector.shape_cast %411 : vector<1x1x8x128xf32> to vector<8x128xf32>
    %c6_298 = arith.constant 6 : index
    %c2_299 = arith.constant 2 : index
    %c0_300 = arith.constant 0 : index
    %c0_301 = arith.constant 0 : index
    %413 = vector.load %arg3[%c6_298, %c2_299, %c0_300, %c0_301] : memref<9x5x8x128xf32, #tpu.memory_space<vmem>>, vector<1x1x8x128xf32>
    %414 = vector.shape_cast %413 : vector<1x1x8x128xf32> to vector<8x128xf32>
    %cst_302 = arith.constant 1.000000e+00 : f32
    %415 = vector.broadcast %cst_302 : f32 to vector<8x128xf32>
    %416 = arith.cmpf oeq, %410, %415 : vector<8x128xf32>
    %c6_303 = arith.constant 6 : index
    %c0_304 = arith.constant 0 : index
    %c0_305 = arith.constant 0 : index
    %c0_306 = arith.constant 0 : index
    %417 = vector.load %arg2[%c6_303, %c0_304, %c0_305, %c0_306] : memref<9x4x8x128xf32, #tpu.memory_space<vmem>>, vector<1x1x8x128xf32>
    %418 = vector.shape_cast %417 : vector<1x1x8x128xf32> to vector<8x128xf32>
    %c6_307 = arith.constant 6 : index
    %c1_308 = arith.constant 1 : index
    %c0_309 = arith.constant 0 : index
    %c0_310 = arith.constant 0 : index
    %419 = vector.load %arg2[%c6_307, %c1_308, %c0_309, %c0_310] : memref<9x4x8x128xf32, #tpu.memory_space<vmem>>, vector<1x1x8x128xf32>
    %420 = vector.shape_cast %419 : vector<1x1x8x128xf32> to vector<8x128xf32>
    %c6_311 = arith.constant 6 : index
    %c2_312 = arith.constant 2 : index
    %c0_313 = arith.constant 0 : index
    %c0_314 = arith.constant 0 : index
    %421 = vector.load %arg2[%c6_311, %c2_312, %c0_313, %c0_314] : memref<9x4x8x128xf32, #tpu.memory_space<vmem>>, vector<1x1x8x128xf32>
    %422 = vector.shape_cast %421 : vector<1x1x8x128xf32> to vector<8x128xf32>
    %c6_315 = arith.constant 6 : index
    %c3_316 = arith.constant 3 : index
    %c0_317 = arith.constant 0 : index
    %c0_318 = arith.constant 0 : index
    %423 = vector.load %arg2[%c6_315, %c3_316, %c0_317, %c0_318] : memref<9x4x8x128xf32, #tpu.memory_space<vmem>>, vector<1x1x8x128xf32>
    %424 = vector.shape_cast %423 : vector<1x1x8x128xf32> to vector<8x128xf32>
    %425 = arith.negf %418 : vector<8x128xf32>
    %426 = math.exp %425 : vector<8x128xf32>
    %cst_319 = arith.constant 1.000000e+00 : f32
    %427 = vector.broadcast %cst_319 : f32 to vector<8x128xf32>
    %428 = arith.addf %427, %426 : vector<8x128xf32>
    %429 = arith.divf %427, %428 : vector<8x128xf32>
    %430 = arith.negf %420 : vector<8x128xf32>
    %431 = math.exp %430 : vector<8x128xf32>
    %cst_320 = arith.constant 1.000000e+00 : f32
    %432 = vector.broadcast %cst_320 : f32 to vector<8x128xf32>
    %433 = arith.addf %432, %431 : vector<8x128xf32>
    %434 = arith.divf %432, %433 : vector<8x128xf32>
    %c6_321 = arith.constant 6 : index
    %c3_322 = arith.constant 3 : index
    %c0_323 = arith.constant 0 : index
    %c0_324 = arith.constant 0 : index
    %435 = vector.load %arg3[%c6_321, %c3_322, %c0_323, %c0_324] : memref<9x5x8x128xf32, #tpu.memory_space<vmem>>, vector<1x1x8x128xf32>
    %436 = vector.shape_cast %435 : vector<1x1x8x128xf32> to vector<8x128xf32>
    %c6_325 = arith.constant 6 : index
    %c4_326 = arith.constant 4 : index
    %c0_327 = arith.constant 0 : index
    %c0_328 = arith.constant 0 : index
    %437 = vector.load %arg3[%c6_325, %c4_326, %c0_327, %c0_328] : memref<9x5x8x128xf32, #tpu.memory_space<vmem>>, vector<1x1x8x128xf32>
    %438 = vector.shape_cast %437 : vector<1x1x8x128xf32> to vector<8x128xf32>
    %439 = arith.subf %429, %412 : vector<8x128xf32>
    %440 = arith.mulf %439, %439 : vector<8x128xf32>
    %441 = arith.subf %434, %414 : vector<8x128xf32>
    %442 = arith.mulf %441, %441 : vector<8x128xf32>
    %443 = arith.addf %440, %442 : vector<8x128xf32>
    %444 = arith.subf %422, %436 : vector<8x128xf32>
    %445 = arith.mulf %444, %444 : vector<8x128xf32>
    %446 = arith.addf %443, %445 : vector<8x128xf32>
    %447 = arith.subf %424, %438 : vector<8x128xf32>
    %448 = arith.mulf %447, %447 : vector<8x128xf32>
    %449 = arith.addf %446, %448 : vector<8x128xf32>
    %cst_329 = arith.constant 0.000000e+00 : f32
    %450 = vector.broadcast %cst_329 : f32 to vector<8x128xf32>
    %451 = arith.select %416, %449, %450 : vector<8x128xi1>, vector<8x128xf32>
    %cst_330 = arith.constant dense<0.000000e+00> : vector<128xf32>
    %452 = vector.multi_reduction <add>, %451, %cst_330 [0] : vector<8x128xf32> to vector<128xf32>
    %453 = vector.shape_cast %452 : vector<128xf32> to vector<1x128xf32>
    %454 = arith.extui %416 : vector<8x128xi1> to vector<8x128xi32>
    %455 = arith.sitofp %454 : vector<8x128xi32> to vector<8x128xf32>
    %cst_331 = arith.constant dense<0.000000e+00> : vector<128xf32>
    %456 = vector.multi_reduction <add>, %455, %cst_331 [0] : vector<8x128xf32> to vector<128xf32>
    %457 = vector.shape_cast %456 : vector<128xf32> to vector<1x128xf32>
    %c0_i32_332 = arith.constant 0 : i32
    %458 = vector.broadcast %c0_i32_332 : i32 to vector<8x128xi32>
    %459 = arith.cmpi eq, %0, %458 : vector<8x128xi32>
    %cst_333 = arith.constant 0.000000e+00 : f32
    %460 = vector.shape_cast %453 : vector<1x128xf32> to vector<1x128xf32>
    %461 = vector.broadcast %460 : vector<1x128xf32> to vector<8x128xf32>
    %462 = vector.broadcast %cst_333 : f32 to vector<8x128xf32>
    %463 = arith.select %459, %461, %462 : vector<8x128xi1>, vector<8x128xf32>
    %c1_i32_334 = arith.constant 1 : i32
    %464 = vector.broadcast %c1_i32_334 : i32 to vector<8x128xi32>
    %465 = arith.cmpi eq, %0, %464 : vector<8x128xi32>
    %cst_335 = arith.constant 0.000000e+00 : f32
    %466 = vector.shape_cast %457 : vector<1x128xf32> to vector<1x128xf32>
    %467 = vector.broadcast %466 : vector<1x128xf32> to vector<8x128xf32>
    %468 = vector.broadcast %cst_335 : f32 to vector<8x128xf32>
    %469 = arith.select %465, %467, %468 : vector<8x128xi1>, vector<8x128xf32>
    %470 = arith.addf %463, %469 : vector<8x128xf32>
    %c0_i32_336 = arith.constant 0 : i32
    %471 = arith.cmpi eq, %arg1, %c0_i32_336 : i32
    %472 = arith.extui %471 : i1 to i32
    %c0_i32_337 = arith.constant 0 : i32
    %473 = arith.cmpi ne, %472, %c0_i32_337 : i32
    scf.if %473 {
      %c6_438 = arith.constant 6 : index
      %c0_439 = arith.constant 0 : index
      %c0_440 = arith.constant 0 : index
      %613 = vector.load %arg4[%c6_438, %c0_439, %c0_440] : memref<9x8x128xf32, #tpu.memory_space<vmem>>, vector<1x8x128xf32>
      %614 = vector.shape_cast %613 : vector<1x8x128xf32> to vector<8x128xf32>
      %615 = vector.shape_cast %470 : vector<8x128xf32> to vector<1x8x128xf32>
      tpu.vector_store %arg4[%c6_438, %c0_439, %c0_440], %615 {strides = array<i32>} : memref<9x8x128xf32, #tpu.memory_space<vmem>>, vector<1x8x128xf32>,
    } else {
    }
    %c0_i32_338 = arith.constant 0 : i32
    %474 = arith.cmpi ne, %arg1, %c0_i32_338 : i32
    %475 = arith.extui %474 : i1 to i32
    %c0_i32_339 = arith.constant 0 : i32
    %476 = arith.cmpi ne, %475, %c0_i32_339 : i32
    scf.if %476 {
      %c6_438 = arith.constant 6 : index
      %c0_439 = arith.constant 0 : index
      %c0_440 = arith.constant 0 : index
      %613 = vector.load %arg4[%c6_438, %c0_439, %c0_440] : memref<9x8x128xf32, #tpu.memory_space<vmem>>, vector<1x8x128xf32>
      %614 = vector.shape_cast %613 : vector<1x8x128xf32> to vector<8x128xf32>
      %615 = arith.addf %614, %470 : vector<8x128xf32>
      %c6_441 = arith.constant 6 : index
      %c0_442 = arith.constant 0 : index
      %c0_443 = arith.constant 0 : index
      %616 = vector.load %arg4[%c6_441, %c0_442, %c0_443] : memref<9x8x128xf32, #tpu.memory_space<vmem>>, vector<1x8x128xf32>
      %617 = vector.shape_cast %616 : vector<1x8x128xf32> to vector<8x128xf32>
      %618 = vector.shape_cast %615 : vector<8x128xf32> to vector<1x8x128xf32>
      tpu.vector_store %arg4[%c6_441, %c0_442, %c0_443], %618 {strides = array<i32>} : memref<9x8x128xf32, #tpu.memory_space<vmem>>, vector<1x8x128xf32>,
    } else {
    }
    %c7 = arith.constant 7 : index
    %c0_340 = arith.constant 0 : index
    %c0_341 = arith.constant 0 : index
    %c0_342 = arith.constant 0 : index
    %477 = vector.load %arg3[%c7, %c0_340, %c0_341, %c0_342] : memref<9x5x8x128xf32, #tpu.memory_space<vmem>>, vector<1x1x8x128xf32>
    %478 = vector.shape_cast %477 : vector<1x1x8x128xf32> to vector<8x128xf32>
    %c7_343 = arith.constant 7 : index
    %c1_344 = arith.constant 1 : index
    %c0_345 = arith.constant 0 : index
    %c0_346 = arith.constant 0 : index
    %479 = vector.load %arg3[%c7_343, %c1_344, %c0_345, %c0_346] : memref<9x5x8x128xf32, #tpu.memory_space<vmem>>, vector<1x1x8x128xf32>
    %480 = vector.shape_cast %479 : vector<1x1x8x128xf32> to vector<8x128xf32>
    %c7_347 = arith.constant 7 : index
    %c2_348 = arith.constant 2 : index
    %c0_349 = arith.constant 0 : index
    %c0_350 = arith.constant 0 : index
    %481 = vector.load %arg3[%c7_347, %c2_348, %c0_349, %c0_350] : memref<9x5x8x128xf32, #tpu.memory_space<vmem>>, vector<1x1x8x128xf32>
    %482 = vector.shape_cast %481 : vector<1x1x8x128xf32> to vector<8x128xf32>
    %cst_351 = arith.constant 1.000000e+00 : f32
    %483 = vector.broadcast %cst_351 : f32 to vector<8x128xf32>
    %484 = arith.cmpf oeq, %478, %483 : vector<8x128xf32>
    %c7_352 = arith.constant 7 : index
    %c0_353 = arith.constant 0 : index
    %c0_354 = arith.constant 0 : index
    %c0_355 = arith.constant 0 : index
    %485 = vector.load %arg2[%c7_352, %c0_353, %c0_354, %c0_355] : memref<9x4x8x128xf32, #tpu.memory_space<vmem>>, vector<1x1x8x128xf32>
    %486 = vector.shape_cast %485 : vector<1x1x8x128xf32> to vector<8x128xf32>
    %c7_356 = arith.constant 7 : index
    %c1_357 = arith.constant 1 : index
    %c0_358 = arith.constant 0 : index
    %c0_359 = arith.constant 0 : index
    %487 = vector.load %arg2[%c7_356, %c1_357, %c0_358, %c0_359] : memref<9x4x8x128xf32, #tpu.memory_space<vmem>>, vector<1x1x8x128xf32>
    %488 = vector.shape_cast %487 : vector<1x1x8x128xf32> to vector<8x128xf32>
    %c7_360 = arith.constant 7 : index
    %c2_361 = arith.constant 2 : index
    %c0_362 = arith.constant 0 : index
    %c0_363 = arith.constant 0 : index
    %489 = vector.load %arg2[%c7_360, %c2_361, %c0_362, %c0_363] : memref<9x4x8x128xf32, #tpu.memory_space<vmem>>, vector<1x1x8x128xf32>
    %490 = vector.shape_cast %489 : vector<1x1x8x128xf32> to vector<8x128xf32>
    %c7_364 = arith.constant 7 : index
    %c3_365 = arith.constant 3 : index
    %c0_366 = arith.constant 0 : index
    %c0_367 = arith.constant 0 : index
    %491 = vector.load %arg2[%c7_364, %c3_365, %c0_366, %c0_367] : memref<9x4x8x128xf32, #tpu.memory_space<vmem>>, vector<1x1x8x128xf32>
    %492 = vector.shape_cast %491 : vector<1x1x8x128xf32> to vector<8x128xf32>
    %493 = arith.negf %486 : vector<8x128xf32>
    %494 = math.exp %493 : vector<8x128xf32>
    %cst_368 = arith.constant 1.000000e+00 : f32
    %495 = vector.broadcast %cst_368 : f32 to vector<8x128xf32>
    %496 = arith.addf %495, %494 : vector<8x128xf32>
    %497 = arith.divf %495, %496 : vector<8x128xf32>
    %498 = arith.negf %488 : vector<8x128xf32>
    %499 = math.exp %498 : vector<8x128xf32>
    %cst_369 = arith.constant 1.000000e+00 : f32
    %500 = vector.broadcast %cst_369 : f32 to vector<8x128xf32>
    %501 = arith.addf %500, %499 : vector<8x128xf32>
    %502 = arith.divf %500, %501 : vector<8x128xf32>
    %c7_370 = arith.constant 7 : index
    %c3_371 = arith.constant 3 : index
    %c0_372 = arith.constant 0 : index
    %c0_373 = arith.constant 0 : index
    %503 = vector.load %arg3[%c7_370, %c3_371, %c0_372, %c0_373] : memref<9x5x8x128xf32, #tpu.memory_space<vmem>>, vector<1x1x8x128xf32>
    %504 = vector.shape_cast %503 : vector<1x1x8x128xf32> to vector<8x128xf32>
    %c7_374 = arith.constant 7 : index
    %c4_375 = arith.constant 4 : index
    %c0_376 = arith.constant 0 : index
    %c0_377 = arith.constant 0 : index
    %505 = vector.load %arg3[%c7_374, %c4_375, %c0_376, %c0_377] : memref<9x5x8x128xf32, #tpu.memory_space<vmem>>, vector<1x1x8x128xf32>
    %506 = vector.shape_cast %505 : vector<1x1x8x128xf32> to vector<8x128xf32>
    %507 = arith.subf %497, %480 : vector<8x128xf32>
    %508 = arith.mulf %507, %507 : vector<8x128xf32>
    %509 = arith.subf %502, %482 : vector<8x128xf32>
    %510 = arith.mulf %509, %509 : vector<8x128xf32>
    %511 = arith.addf %508, %510 : vector<8x128xf32>
    %512 = arith.subf %490, %504 : vector<8x128xf32>
    %513 = arith.mulf %512, %512 : vector<8x128xf32>
    %514 = arith.addf %511, %513 : vector<8x128xf32>
    %515 = arith.subf %492, %506 : vector<8x128xf32>
    %516 = arith.mulf %515, %515 : vector<8x128xf32>
    %517 = arith.addf %514, %516 : vector<8x128xf32>
    %cst_378 = arith.constant 0.000000e+00 : f32
    %518 = vector.broadcast %cst_378 : f32 to vector<8x128xf32>
    %519 = arith.select %484, %517, %518 : vector<8x128xi1>, vector<8x128xf32>
    %cst_379 = arith.constant dense<0.000000e+00> : vector<128xf32>
    %520 = vector.multi_reduction <add>, %519, %cst_379 [0] : vector<8x128xf32> to vector<128xf32>
    %521 = vector.shape_cast %520 : vector<128xf32> to vector<1x128xf32>
    %522 = arith.extui %484 : vector<8x128xi1> to vector<8x128xi32>
    %523 = arith.sitofp %522 : vector<8x128xi32> to vector<8x128xf32>
    %cst_380 = arith.constant dense<0.000000e+00> : vector<128xf32>
    %524 = vector.multi_reduction <add>, %523, %cst_380 [0] : vector<8x128xf32> to vector<128xf32>
    %525 = vector.shape_cast %524 : vector<128xf32> to vector<1x128xf32>
    %c0_i32_381 = arith.constant 0 : i32
    %526 = vector.broadcast %c0_i32_381 : i32 to vector<8x128xi32>
    %527 = arith.cmpi eq, %0, %526 : vector<8x128xi32>
    %cst_382 = arith.constant 0.000000e+00 : f32
    %528 = vector.shape_cast %521 : vector<1x128xf32> to vector<1x128xf32>
    %529 = vector.broadcast %528 : vector<1x128xf32> to vector<8x128xf32>
    %530 = vector.broadcast %cst_382 : f32 to vector<8x128xf32>
    %531 = arith.select %527, %529, %530 : vector<8x128xi1>, vector<8x128xf32>
    %c1_i32_383 = arith.constant 1 : i32
    %532 = vector.broadcast %c1_i32_383 : i32 to vector<8x128xi32>
    %533 = arith.cmpi eq, %0, %532 : vector<8x128xi32>
    %cst_384 = arith.constant 0.000000e+00 : f32
    %534 = vector.shape_cast %525 : vector<1x128xf32> to vector<1x128xf32>
    %535 = vector.broadcast %534 : vector<1x128xf32> to vector<8x128xf32>
    %536 = vector.broadcast %cst_384 : f32 to vector<8x128xf32>
    %537 = arith.select %533, %535, %536 : vector<8x128xi1>, vector<8x128xf32>
    %538 = arith.addf %531, %537 : vector<8x128xf32>
    %c0_i32_385 = arith.constant 0 : i32
    %539 = arith.cmpi eq, %arg1, %c0_i32_385 : i32
    %540 = arith.extui %539 : i1 to i32
    %c0_i32_386 = arith.constant 0 : i32
    %541 = arith.cmpi ne, %540, %c0_i32_386 : i32
    scf.if %541 {
      %c7_438 = arith.constant 7 : index
      %c0_439 = arith.constant 0 : index
      %c0_440 = arith.constant 0 : index
      %613 = vector.load %arg4[%c7_438, %c0_439, %c0_440] : memref<9x8x128xf32, #tpu.memory_space<vmem>>, vector<1x8x128xf32>
      %614 = vector.shape_cast %613 : vector<1x8x128xf32> to vector<8x128xf32>
      %615 = vector.shape_cast %538 : vector<8x128xf32> to vector<1x8x128xf32>
      tpu.vector_store %arg4[%c7_438, %c0_439, %c0_440], %615 {strides = array<i32>} : memref<9x8x128xf32, #tpu.memory_space<vmem>>, vector<1x8x128xf32>,
    } else {
    }
    %c0_i32_387 = arith.constant 0 : i32
    %542 = arith.cmpi ne, %arg1, %c0_i32_387 : i32
    %543 = arith.extui %542 : i1 to i32
    %c0_i32_388 = arith.constant 0 : i32
    %544 = arith.cmpi ne, %543, %c0_i32_388 : i32
    scf.if %544 {
      %c7_438 = arith.constant 7 : index
      %c0_439 = arith.constant 0 : index
      %c0_440 = arith.constant 0 : index
      %613 = vector.load %arg4[%c7_438, %c0_439, %c0_440] : memref<9x8x128xf32, #tpu.memory_space<vmem>>, vector<1x8x128xf32>
      %614 = vector.shape_cast %613 : vector<1x8x128xf32> to vector<8x128xf32>
      %615 = arith.addf %614, %538 : vector<8x128xf32>
      %c7_441 = arith.constant 7 : index
      %c0_442 = arith.constant 0 : index
      %c0_443 = arith.constant 0 : index
      %616 = vector.load %arg4[%c7_441, %c0_442, %c0_443] : memref<9x8x128xf32, #tpu.memory_space<vmem>>, vector<1x8x128xf32>
      %617 = vector.shape_cast %616 : vector<1x8x128xf32> to vector<8x128xf32>
      %618 = vector.shape_cast %615 : vector<8x128xf32> to vector<1x8x128xf32>
      tpu.vector_store %arg4[%c7_441, %c0_442, %c0_443], %618 {strides = array<i32>} : memref<9x8x128xf32, #tpu.memory_space<vmem>>, vector<1x8x128xf32>,
    } else {
    }
    %c8 = arith.constant 8 : index
    %c0_389 = arith.constant 0 : index
    %c0_390 = arith.constant 0 : index
    %c0_391 = arith.constant 0 : index
    %545 = vector.load %arg3[%c8, %c0_389, %c0_390, %c0_391] : memref<9x5x8x128xf32, #tpu.memory_space<vmem>>, vector<1x1x8x128xf32>
    %546 = vector.shape_cast %545 : vector<1x1x8x128xf32> to vector<8x128xf32>
    %c8_392 = arith.constant 8 : index
    %c1_393 = arith.constant 1 : index
    %c0_394 = arith.constant 0 : index
    %c0_395 = arith.constant 0 : index
    %547 = vector.load %arg3[%c8_392, %c1_393, %c0_394, %c0_395] : memref<9x5x8x128xf32, #tpu.memory_space<vmem>>, vector<1x1x8x128xf32>
    %548 = vector.shape_cast %547 : vector<1x1x8x128xf32> to vector<8x128xf32>
    %c8_396 = arith.constant 8 : index
    %c2_397 = arith.constant 2 : index
    %c0_398 = arith.constant 0 : index
    %c0_399 = arith.constant 0 : index
    %549 = vector.load %arg3[%c8_396, %c2_397, %c0_398, %c0_399] : memref<9x5x8x128xf32, #tpu.memory_space<vmem>>, vector<1x1x8x128xf32>
    %550 = vector.shape_cast %549 : vector<1x1x8x128xf32> to vector<8x128xf32>
    %cst_400 = arith.constant 1.000000e+00 : f32
    %551 = vector.broadcast %cst_400 : f32 to vector<8x128xf32>
    %552 = arith.cmpf oeq, %546, %551 : vector<8x128xf32>
    %c8_401 = arith.constant 8 : index
    %c0_402 = arith.constant 0 : index
    %c0_403 = arith.constant 0 : index
    %c0_404 = arith.constant 0 : index
    %553 = vector.load %arg2[%c8_401, %c0_402, %c0_403, %c0_404] : memref<9x4x8x128xf32, #tpu.memory_space<vmem>>, vector<1x1x8x128xf32>
    %554 = vector.shape_cast %553 : vector<1x1x8x128xf32> to vector<8x128xf32>
    %c8_405 = arith.constant 8 : index
    %c1_406 = arith.constant 1 : index
    %c0_407 = arith.constant 0 : index
    %c0_408 = arith.constant 0 : index
    %555 = vector.load %arg2[%c8_405, %c1_406, %c0_407, %c0_408] : memref<9x4x8x128xf32, #tpu.memory_space<vmem>>, vector<1x1x8x128xf32>
    %556 = vector.shape_cast %555 : vector<1x1x8x128xf32> to vector<8x128xf32>
    %c8_409 = arith.constant 8 : index
    %c2_410 = arith.constant 2 : index
    %c0_411 = arith.constant 0 : index
    %c0_412 = arith.constant 0 : index
    %557 = vector.load %arg2[%c8_409, %c2_410, %c0_411, %c0_412] : memref<9x4x8x128xf32, #tpu.memory_space<vmem>>, vector<1x1x8x128xf32>
    %558 = vector.shape_cast %557 : vector<1x1x8x128xf32> to vector<8x128xf32>
    %c8_413 = arith.constant 8 : index
    %c3_414 = arith.constant 3 : index
    %c0_415 = arith.constant 0 : index
    %c0_416 = arith.constant 0 : index
    %559 = vector.load %arg2[%c8_413, %c3_414, %c0_415, %c0_416] : memref<9x4x8x128xf32, #tpu.memory_space<vmem>>, vector<1x1x8x128xf32>
    %560 = vector.shape_cast %559 : vector<1x1x8x128xf32> to vector<8x128xf32>
    %561 = arith.negf %554 : vector<8x128xf32>
    %562 = math.exp %561 : vector<8x128xf32>
    %cst_417 = arith.constant 1.000000e+00 : f32
    %563 = vector.broadcast %cst_417 : f32 to vector<8x128xf32>
    %564 = arith.addf %563, %562 : vector<8x128xf32>
    %565 = arith.divf %563, %564 : vector<8x128xf32>
    %566 = arith.negf %556 : vector<8x128xf32>
    %567 = math.exp %566 : vector<8x128xf32>
    %cst_418 = arith.constant 1.000000e+00 : f32
    %568 = vector.broadcast %cst_418 : f32 to vector<8x128xf32>
    %569 = arith.addf %568, %567 : vector<8x128xf32>
    %570 = arith.divf %568, %569 : vector<8x128xf32>
    %c8_419 = arith.constant 8 : index
    %c3_420 = arith.constant 3 : index
    %c0_421 = arith.constant 0 : index
    %c0_422 = arith.constant 0 : index
    %571 = vector.load %arg3[%c8_419, %c3_420, %c0_421, %c0_422] : memref<9x5x8x128xf32, #tpu.memory_space<vmem>>, vector<1x1x8x128xf32>
    %572 = vector.shape_cast %571 : vector<1x1x8x128xf32> to vector<8x128xf32>
    %c8_423 = arith.constant 8 : index
    %c4_424 = arith.constant 4 : index
    %c0_425 = arith.constant 0 : index
    %c0_426 = arith.constant 0 : index
    %573 = vector.load %arg3[%c8_423, %c4_424, %c0_425, %c0_426] : memref<9x5x8x128xf32, #tpu.memory_space<vmem>>, vector<1x1x8x128xf32>
    %574 = vector.shape_cast %573 : vector<1x1x8x128xf32> to vector<8x128xf32>
    %575 = arith.subf %565, %548 : vector<8x128xf32>
    %576 = arith.mulf %575, %575 : vector<8x128xf32>
    %577 = arith.subf %570, %550 : vector<8x128xf32>
    %578 = arith.mulf %577, %577 : vector<8x128xf32>
    %579 = arith.addf %576, %578 : vector<8x128xf32>
    %580 = arith.subf %558, %572 : vector<8x128xf32>
    %581 = arith.mulf %580, %580 : vector<8x128xf32>
    %582 = arith.addf %579, %581 : vector<8x128xf32>
    %583 = arith.subf %560, %574 : vector<8x128xf32>
    %584 = arith.mulf %583, %583 : vector<8x128xf32>
    %585 = arith.addf %582, %584 : vector<8x128xf32>
    %cst_427 = arith.constant 0.000000e+00 : f32
    %586 = vector.broadcast %cst_427 : f32 to vector<8x128xf32>
    %587 = arith.select %552, %585, %586 : vector<8x128xi1>, vector<8x128xf32>
    %cst_428 = arith.constant dense<0.000000e+00> : vector<128xf32>
    %588 = vector.multi_reduction <add>, %587, %cst_428 [0] : vector<8x128xf32> to vector<128xf32>
    %589 = vector.shape_cast %588 : vector<128xf32> to vector<1x128xf32>
    %590 = arith.extui %552 : vector<8x128xi1> to vector<8x128xi32>
    %591 = arith.sitofp %590 : vector<8x128xi32> to vector<8x128xf32>
    %cst_429 = arith.constant dense<0.000000e+00> : vector<128xf32>
    %592 = vector.multi_reduction <add>, %591, %cst_429 [0] : vector<8x128xf32> to vector<128xf32>
    %593 = vector.shape_cast %592 : vector<128xf32> to vector<1x128xf32>
    %c0_i32_430 = arith.constant 0 : i32
    %594 = vector.broadcast %c0_i32_430 : i32 to vector<8x128xi32>
    %595 = arith.cmpi eq, %0, %594 : vector<8x128xi32>
    %cst_431 = arith.constant 0.000000e+00 : f32
    %596 = vector.shape_cast %589 : vector<1x128xf32> to vector<1x128xf32>
    %597 = vector.broadcast %596 : vector<1x128xf32> to vector<8x128xf32>
    %598 = vector.broadcast %cst_431 : f32 to vector<8x128xf32>
    %599 = arith.select %595, %597, %598 : vector<8x128xi1>, vector<8x128xf32>
    %c1_i32_432 = arith.constant 1 : i32
    %600 = vector.broadcast %c1_i32_432 : i32 to vector<8x128xi32>
    %601 = arith.cmpi eq, %0, %600 : vector<8x128xi32>
    %cst_433 = arith.constant 0.000000e+00 : f32
    %602 = vector.shape_cast %593 : vector<1x128xf32> to vector<1x128xf32>
    %603 = vector.broadcast %602 : vector<1x128xf32> to vector<8x128xf32>
    %604 = vector.broadcast %cst_433 : f32 to vector<8x128xf32>
    %605 = arith.select %601, %603, %604 : vector<8x128xi1>, vector<8x128xf32>
    %606 = arith.addf %599, %605 : vector<8x128xf32>
    %c0_i32_434 = arith.constant 0 : i32
    %607 = arith.cmpi eq, %arg1, %c0_i32_434 : i32
    %608 = arith.extui %607 : i1 to i32
    %c0_i32_435 = arith.constant 0 : i32
    %609 = arith.cmpi ne, %608, %c0_i32_435 : i32
    scf.if %609 {
      %c8_438 = arith.constant 8 : index
      %c0_439 = arith.constant 0 : index
      %c0_440 = arith.constant 0 : index
      %613 = vector.load %arg4[%c8_438, %c0_439, %c0_440] : memref<9x8x128xf32, #tpu.memory_space<vmem>>, vector<1x8x128xf32>
      %614 = vector.shape_cast %613 : vector<1x8x128xf32> to vector<8x128xf32>
      %615 = vector.shape_cast %606 : vector<8x128xf32> to vector<1x8x128xf32>
      tpu.vector_store %arg4[%c8_438, %c0_439, %c0_440], %615 {strides = array<i32>} : memref<9x8x128xf32, #tpu.memory_space<vmem>>, vector<1x8x128xf32>,
    } else {
    }
    %c0_i32_436 = arith.constant 0 : i32
    %610 = arith.cmpi ne, %arg1, %c0_i32_436 : i32
    %611 = arith.extui %610 : i1 to i32
    %c0_i32_437 = arith.constant 0 : i32
    %612 = arith.cmpi ne, %611, %c0_i32_437 : i32
    scf.if %612 {
      %c8_438 = arith.constant 8 : index
      %c0_439 = arith.constant 0 : index
      %c0_440 = arith.constant 0 : index
      %613 = vector.load %arg4[%c8_438, %c0_439, %c0_440] : memref<9x8x128xf32, #tpu.memory_space<vmem>>, vector<1x8x128xf32>
      %614 = vector.shape_cast %613 : vector<1x8x128xf32> to vector<8x128xf32>
      %615 = arith.addf %614, %606 : vector<8x128xf32>
      %c8_441 = arith.constant 8 : index
      %c0_442 = arith.constant 0 : index
      %c0_443 = arith.constant 0 : index
      %616 = vector.load %arg4[%c8_441, %c0_442, %c0_443] : memref<9x8x128xf32, #tpu.memory_space<vmem>>, vector<1x8x128xf32>
      %617 = vector.shape_cast %616 : vector<1x8x128xf32> to vector<8x128xf32>
      %618 = vector.shape_cast %615 : vector<8x128xf32> to vector<1x8x128xf32>
      tpu.vector_store %arg4[%c8_441, %c0_442, %c0_443], %618 {strides = array<i32>} : memref<9x8x128xf32, #tpu.memory_space<vmem>>, vector<1x8x128xf32>,
    } else {
    }
    return
  }
  func.func @transform_0(%arg0: i32, %arg1: i32) -> (i32, i32, i32, i32) {
    %c0_i32 = arith.constant 0 : i32
    %c0_i32_0 = arith.constant 0 : i32
    %c0_i32_1 = arith.constant 0 : i32
    %c0_i32_2 = arith.constant 0 : i32
    %c0_i32_3 = arith.constant 0 : i32
    return %c0_i32, %c0_i32_0, %c0_i32_1, %c0_i32_2 : i32, i32, i32, i32
  }
  func.func @transform_1(%arg0: i32, %arg1: i32) -> (i32, i32, i32, i32) {
    %c0_i32 = arith.constant 0 : i32
    %c0_i32_0 = arith.constant 0 : i32
    %c0_i32_1 = arith.constant 0 : i32
    %c0_i32_2 = arith.constant 0 : i32
    %c0_i32_3 = arith.constant 0 : i32
    return %c0_i32, %c0_i32_0, %c0_i32_1, %c0_i32_2 : i32, i32, i32, i32
  }
  func.func @transform_2(%arg0: i32, %arg1: i32) -> (i32, i32, i32) {
    %c0_i32 = arith.constant 0 : i32
    %c0_i32_0 = arith.constant 0 : i32
    %c0_i32_1 = arith.constant 0 : i32
    %c0_i32_2 = arith.constant 0 : i32
    return %c0_i32, %c0_i32_0, %c0_i32_1 : i32, i32, i32
  }
}

</mosaic_0001>

<llo_original>
// kernel: yolo_loss.1
$region0: #{yolo_loss.1}
  #allocation0 [shape = 'u32[]', space=smem, size = 0x4, offset = 0x4, fixed_abs, tag = 'smem constant byte address 0x4 - core index']
  #allocation1 [shape = 'u32[144,128]{1,0:T(1,128)}', space=vmem, size = 0x12000, scoped, tag = 'internal scratch']
  %s0 = inlined_call_operand.vmem [shape: f32[9,4,8,128], index: 0, kind: input, shape index: {}]
  %s1 = inlined_call_operand.vmem [shape: f32[9,5,8,128], index: 1, kind: input, shape index: {}]
  %s2 = inlined_call_operand.vmem [shape: f32[9,8,128], index: 2, kind: output, shape index: {}]
  %s3 = sld [smem:[#allocation0]]
  $region90: #{yolo_loss.1} parent=0
    _
  %s5 = ssub.s32 1, %s3
  %s6 = scalar_select 0, %s5, %s3
  // Predicated region
  $region2: #{yolo_loss.1} parent=0 // pred_check
    _
  $region3: #{yolo_loss.1} parent=0 // pred_check_branch
    %8 = sbr.rel (0) target = $region5
  $region4: #{yolo_loss.1} parent=0 // pred_region
    _
  $region5: #{yolo_loss.1} parent=0 // pred_fallthru
    _
  // Predicated region
  $region6: #{yolo_loss.1} parent=0 // pred_check
    _
  $region7: #{yolo_loss.1} parent=0 // pred_check_branch
    %10 = sbr.rel (0) target = $region9
  $region8: #{yolo_loss.1} parent=0 // pred_region
    _
  $region9: #{yolo_loss.1} parent=0 // pred_fallthru
    _
  %v11 = vlaneseq
  %v12 = vshrl.u32 %v11, 7
  %v13 = vld [vmem:[%s1] sm:$0xff]
  %s14 = scalar_lea.vmem %s1, 8
  %v15 = vld [vmem:[%s14] sm:$0xff]
  %s16 = scalar_lea.vmem %s1, 16
  %v17 = vld [vmem:[%s16] sm:$0xff]
  %vm18 = vcmp.eq.f32.partialorder %v13, 1.0
  %v19 = vld [vmem:[%s0] sm:$0xff]
  %s20 = scalar_lea.vmem %s0, 8
  %v21 = vld [vmem:[%s20] sm:$0xff]
  %s22 = scalar_lea.vmem %s0, 16
  %v23 = vld [vmem:[%s22] sm:$0xff]
  %s24 = scalar_lea.vmem %s0, 24
  %v25 = vld [vmem:[%s24] sm:$0xff]
  %v26 = vxor.u32 %v19, 2147483648
  %v27 = vmul.f32 %v26, 1.442695
  %v28 = vpow.pop %v27
  %v29 = vadd.f32 %v28, 1.0
  %v30 = vrcp.pop %v29
  %v31 = vmul.f32 1.0, %v30
  %v32 = vxor.u32 %v21, 2147483648
  %v33 = vmul.f32 %v32, 1.442695
  %v34 = vpow.pop %v33
  %v35 = vadd.f32 %v34, 1.0
  %v36 = vrcp.pop %v35
  %v37 = vmul.f32 1.0, %v36
  %s38 = scalar_lea.vmem %s1, 24
  %v39 = vld [vmem:[%s38] sm:$0xff]
  %s40 = scalar_lea.vmem %s1, 32
  %v41 = vld [vmem:[%s40] sm:$0xff]
  %v42 = vsub.f32 %v31, %v15
  %v43 = vmul.f32 %v42, %v42
  %v44 = vsub.f32 %v37, %v17
  %v45 = vmul.f32 %v44, %v44
  %v46 = vadd.f32 %v43, %v45
  %v47 = vsub.f32 %v23, %v39
  %v48 = vmul.f32 %v47, %v47
  %v49 = vadd.f32 %v46, %v48
  %v50 = vsub.f32 %v25, %v41
  %v51 = vmul.f32 %v50, %v50
  %v52 = vadd.f32 %v49, %v51
  %v53 = vsel %vm18, %v52, 0.0
  %v54 = vrot.slane %v53, 4
  %v55 = vadd.f32 %v53, %v54
  %v56 = vrot.slane %v55, 2
  %v57 = vadd.f32 %v55, %v56
  %v58 = vrot.slane %v57, 1
  %v59 = vadd.f32 %v57, %v58
  %v60 = vsel %vm18, 1, 0
  %v61 = vcvt.s32.f32 %v60
  %v62 = vrot.slane %v61, 4
  %v63 = vadd.f32 %v61, %v62
  %v64 = vrot.slane %v63, 2
  %v65 = vadd.f32 %v63, %v64
  %v66 = vrot.slane %v65, 1
  %v67 = vadd.f32 %v65, %v66
  %vm68 = vcmp.eq.s32.totalorder %v12, 0
  %v69 = vsel %vm68, %v59, 0.0
  %vm70 = vcmp.eq.s32.totalorder %v12, 1
  %v71 = vsel %vm70, %v67, 0.0
  %v72 = vadd.f32 %v69, %v71
  %p73 = scmp.eq.s32.totalorder 0, 0
  // Predicated region
  $region10: #{yolo_loss.1} parent=0 // pred_check
    %p74 = pneg %p73
  $region11: #{yolo_loss.1} parent=0 // pred_check_branch
    %76 = sbr.rel (%p74) target = $region13
  $region12: #{yolo_loss.1} parent=0 // pred_region
    %77 = vst [vmem:[%s2] sm:$0xff] %v72
  $region13: #{yolo_loss.1} parent=0 // pred_fallthru
    _
  %p78 = scmp.ne.s32.totalorder 0, 0
  // Predicated region
  $region14: #{yolo_loss.1} parent=0 // pred_check
    %p79 = pneg %p78
  $region15: #{yolo_loss.1} parent=0 // pred_check_branch
    %81 = sbr.rel (%p79) target = $region17
  $region16: #{yolo_loss.1} parent=0 // pred_region
    %v82 = vld [vmem:[%s2] sm:$0xff]
    %v83 = vadd.f32 %v82, %v72
    %84 = vst [vmem:[%s2] sm:$0xff] %v83
  $region17: #{yolo_loss.1} parent=0 // pred_fallthru
    _
  %s85 = scalar_lea.vmem %s1, 40
  %v86 = vld [vmem:[%s85] sm:$0xff]
  %s87 = scalar_lea.vmem %s1, 48
  %v88 = vld [vmem:[%s87] sm:$0xff]
  %s89 = scalar_lea.vmem %s1, 56
  %v90 = vld [vmem:[%s89] sm:$0xff]
  %vm91 = vcmp.eq.f32.partialorder %v86, 1.0
  %s92 = scalar_lea.vmem %s0, 32
  %v93 = vld [vmem:[%s92] sm:$0xff]
  %s94 = scalar_lea.vmem %s0, 40
  %v95 = vld [vmem:[%s94] sm:$0xff]
  %s96 = scalar_lea.vmem %s0, 48
  %v97 = vld [vmem:[%s96] sm:$0xff]
  %s98 = scalar_lea.vmem %s0, 56
  %v99 = vld [vmem:[%s98] sm:$0xff]
  %v100 = vxor.u32 %v93, 2147483648
  %v101 = vmul.f32 %v100, 1.442695
  %v102 = vpow.pop %v101
  %v103 = vadd.f32 %v102, 1.0
  %v104 = vrcp.pop %v103
  %v105 = vmul.f32 1.0, %v104
  %v106 = vxor.u32 %v95, 2147483648
  %v107 = vmul.f32 %v106, 1.442695
  %v108 = vpow.pop %v107
  %v109 = vadd.f32 %v108, 1.0
  %v110 = vrcp.pop %v109
  %v111 = vmul.f32 1.0, %v110
  %s112 = scalar_lea.vmem %s1, 64
  %v113 = vld [vmem:[%s112] sm:$0xff]
  %s114 = scalar_lea.vmem %s1, 72
  %v115 = vld [vmem:[%s114] sm:$0xff]
  %v116 = vsub.f32 %v105, %v88
  %v117 = vmul.f32 %v116, %v116
  %v118 = vsub.f32 %v111, %v90
  %v119 = vmul.f32 %v118, %v118
  %v120 = vadd.f32 %v117, %v119
  %v121 = vsub.f32 %v97, %v113
  %v122 = vmul.f32 %v121, %v121
  %v123 = vadd.f32 %v120, %v122
  %v124 = vsub.f32 %v99, %v115
  %v125 = vmul.f32 %v124, %v124
  %v126 = vadd.f32 %v123, %v125
  %v127 = vsel %vm91, %v126, 0.0
  %v128 = vrot.slane %v127, 4
  %v129 = vadd.f32 %v127, %v128
  %v130 = vrot.slane %v129, 2
  %v131 = vadd.f32 %v129, %v130
  %v132 = vrot.slane %v131, 1
  %v133 = vadd.f32 %v131, %v132
  %v134 = vsel %vm91, 1, 0
  %v135 = vcvt.s32.f32 %v134
  %v136 = vrot.slane %v135, 4
  %v137 = vadd.f32 %v135, %v136
  %v138 = vrot.slane %v137, 2
  %v139 = vadd.f32 %v137, %v138
  %v140 = vrot.slane %v139, 1
  %v141 = vadd.f32 %v139, %v140
  %v142 = vsel %vm68, %v133, 0.0
  %v143 = vsel %vm70, %v141, 0.0
  %v144 = vadd.f32 %v142, %v143
  // Predicated region
  $region18: #{yolo_loss.1} parent=0 // pred_check
    %p145 = pneg %p73
  $region19: #{yolo_loss.1} parent=0 // pred_check_branch
    %147 = sbr.rel (%p145) target = $region21
  $region20: #{yolo_loss.1} parent=0 // pred_region
    %s148 = scalar_lea.vmem %s2, 8
    %149 = vst [vmem:[%s148] sm:$0xff] %v144
  $region21: #{yolo_loss.1} parent=0 // pred_fallthru
    _
  // Predicated region
  $region22: #{yolo_loss.1} parent=0 // pred_check
    %p150 = pneg %p78
  $region23: #{yolo_loss.1} parent=0 // pred_check_branch
    %152 = sbr.rel (%p150) target = $region25
  $region24: #{yolo_loss.1} parent=0 // pred_region
    %s153 = scalar_lea.vmem %s2, 8
    %v154 = vld [vmem:[%s153] sm:$0xff]
    %v155 = vadd.f32 %v154, %v144
    %156 = vst [vmem:[%s153] sm:$0xff] %v155
  $region25: #{yolo_loss.1} parent=0 // pred_fallthru
    _
  %s157 = scalar_lea.vmem %s1, 80
  %v158 = vld [vmem:[%s157] sm:$0xff]
  %s159 = scalar_lea.vmem %s1, 88
  %v160 = vld [vmem:[%s159] sm:$0xff]
  %s161 = scalar_lea.vmem %s1, 96
  %v162 = vld [vmem:[%s161] sm:$0xff]
  %vm163 = vcmp.eq.f32.partialorder %v158, 1.0
  %s164 = scalar_lea.vmem %s0, 64
  %v165 = vld [vmem:[%s164] sm:$0xff]
  %s166 = scalar_lea.vmem %s0, 72
  %v167 = vld [vmem:[%s166] sm:$0xff]
  %s168 = scalar_lea.vmem %s0, 80
  %v169 = vld [vmem:[%s168] sm:$0xff]
  %s170 = scalar_lea.vmem %s0, 88
  %v171 = vld [vmem:[%s170] sm:$0xff]
  %v172 = vxor.u32 %v165, 2147483648
  %v173 = vmul.f32 %v172, 1.442695
  %v174 = vpow.pop %v173
  %v175 = vadd.f32 %v174, 1.0
  %v176 = vrcp.pop %v175
  %v177 = vmul.f32 1.0, %v176
  %v178 = vxor.u32 %v167, 2147483648
  %v179 = vmul.f32 %v178, 1.442695
  %v180 = vpow.pop %v179
  %v181 = vadd.f32 %v180, 1.0
  %v182 = vrcp.pop %v181
  %v183 = vmul.f32 1.0, %v182
  %s184 = scalar_lea.vmem %s1, 104
  %v185 = vld [vmem:[%s184] sm:$0xff]
  %s186 = scalar_lea.vmem %s1, 112
  %v187 = vld [vmem:[%s186] sm:$0xff]
  %v188 = vsub.f32 %v177, %v160
  %v189 = vmul.f32 %v188, %v188
  %v190 = vsub.f32 %v183, %v162
  %v191 = vmul.f32 %v190, %v190
  %v192 = vadd.f32 %v189, %v191
  %v193 = vsub.f32 %v169, %v185
  %v194 = vmul.f32 %v193, %v193
  %v195 = vadd.f32 %v192, %v194
  %v196 = vsub.f32 %v171, %v187
  %v197 = vmul.f32 %v196, %v196
  %v198 = vadd.f32 %v195, %v197
  %v199 = vsel %vm163, %v198, 0.0
  %v200 = vrot.slane %v199, 4
  %v201 = vadd.f32 %v199, %v200
  %v202 = vrot.slane %v201, 2
  %v203 = vadd.f32 %v201, %v202
  %v204 = vrot.slane %v203, 1
  %v205 = vadd.f32 %v203, %v204
  %v206 = vsel %vm163, 1, 0
  %v207 = vcvt.s32.f32 %v206
  %v208 = vrot.slane %v207, 4
  %v209 = vadd.f32 %v207, %v208
  %v210 = vrot.slane %v209, 2
  %v211 = vadd.f32 %v209, %v210
  %v212 = vrot.slane %v211, 1
  %v213 = vadd.f32 %v211, %v212
  %v214 = vsel %vm68, %v205, 0.0
  %v215 = vsel %vm70, %v213, 0.0
  %v216 = vadd.f32 %v214, %v215
  // Predicated region
  $region26: #{yolo_loss.1} parent=0 // pred_check
    %p217 = pneg %p73
  $region27: #{yolo_loss.1} parent=0 // pred_check_branch
    %219 = sbr.rel (%p217) target = $region29
  $region28: #{yolo_loss.1} parent=0 // pred_region
    %s220 = scalar_lea.vmem %s2, 16
    %221 = vst [vmem:[%s220] sm:$0xff] %v216
  $region29: #{yolo_loss.1} parent=0 // pred_fallthru
    _
  // Predicated region
  $region30: #{yolo_loss.1} parent=0 // pred_check
    %p222 = pneg %p78
  $region31: #{yolo_loss.1} parent=0 // pred_check_branch
    %224 = sbr.rel (%p222) target = $region33
  $region32: #{yolo_loss.1} parent=0 // pred_region
    %s225 = scalar_lea.vmem %s2, 16
    %v226 = vld [vmem:[%s225] sm:$0xff]
    %v227 = vadd.f32 %v226, %v216
    %228 = vst [vmem:[%s225] sm:$0xff] %v227
  $region33: #{yolo_loss.1} parent=0 // pred_fallthru
    _
  %s229 = scalar_lea.vmem %s1, 120
  %v230 = vld [vmem:[%s229] sm:$0xff]
  %s231 = scalar_lea.vmem %s1, 128
  %v232 = vld [vmem:[%s231] sm:$0xff]
  %s233 = scalar_lea.vmem %s1, 136
  %v234 = vld [vmem:[%s233] sm:$0xff]
  %vm235 = vcmp.eq.f32.partialorder %v230, 1.0
  %s236 = scalar_lea.vmem %s0, 96
  %v237 = vld [vmem:[%s236] sm:$0xff]
  %s238 = scalar_lea.vmem %s0, 104
  %v239 = vld [vmem:[%s238] sm:$0xff]
  %s240 = scalar_lea.vmem %s0, 112
  %v241 = vld [vmem:[%s240] sm:$0xff]
  %s242 = scalar_lea.vmem %s0, 120
  %v243 = vld [vmem:[%s242] sm:$0xff]
  %v244 = vxor.u32 %v237, 2147483648
  %v245 = vmul.f32 %v244, 1.442695
  %v246 = vpow.pop %v245
  %v247 = vadd.f32 %v246, 1.0
  %v248 = vrcp.pop %v247
  %v249 = vmul.f32 1.0, %v248
  %v250 = vxor.u32 %v239, 2147483648
  %v251 = vmul.f32 %v250, 1.442695
  %v252 = vpow.pop %v251
  %v253 = vadd.f32 %v252, 1.0
  %v254 = vrcp.pop %v253
  %v255 = vmul.f32 1.0, %v254
  %s256 = scalar_lea.vmem %s1, 144
  %v257 = vld [vmem:[%s256] sm:$0xff]
  %s258 = scalar_lea.vmem %s1, 152
  %v259 = vld [vmem:[%s258] sm:$0xff]
  %v260 = vsub.f32 %v249, %v232
  %v261 = vmul.f32 %v260, %v260
  %v262 = vsub.f32 %v255, %v234
  %v263 = vmul.f32 %v262, %v262
  %v264 = vadd.f32 %v261, %v263
  %v265 = vsub.f32 %v241, %v257
  %v266 = vmul.f32 %v265, %v265
  %v267 = vadd.f32 %v264, %v266
  %v268 = vsub.f32 %v243, %v259
  %v269 = vmul.f32 %v268, %v268
  %v270 = vadd.f32 %v267, %v269
  %v271 = vsel %vm235, %v270, 0.0
  %v272 = vrot.slane %v271, 4
  %v273 = vadd.f32 %v271, %v272
  %v274 = vrot.slane %v273, 2
  %v275 = vadd.f32 %v273, %v274
  %v276 = vrot.slane %v275, 1
  %v277 = vadd.f32 %v275, %v276
  %v278 = vsel %vm235, 1, 0
  %v279 = vcvt.s32.f32 %v278
  %v280 = vrot.slane %v279, 4
  %v281 = vadd.f32 %v279, %v280
  %v282 = vrot.slane %v281, 2
  %v283 = vadd.f32 %v281, %v282
  %v284 = vrot.slane %v283, 1
  %v285 = vadd.f32 %v283, %v284
  %v286 = vsel %vm68, %v277, 0.0
  %v287 = vsel %vm70, %v285, 0.0
  %v288 = vadd.f32 %v286, %v287
  // Predicated region
  $region34: #{yolo_loss.1} parent=0 // pred_check
    %p289 = pneg %p73
  $region35: #{yolo_loss.1} parent=0 // pred_check_branch
    %291 = sbr.rel (%p289) target = $region37
  $region36: #{yolo_loss.1} parent=0 // pred_region
    %s292 = scalar_lea.vmem %s2, 24
    %293 = vst [vmem:[%s292] sm:$0xff] %v288
  $region37: #{yolo_loss.1} parent=0 // pred_fallthru
    _
  // Predicated region
  $region38: #{yolo_loss.1} parent=0 // pred_check
    %p294 = pneg %p78
  $region39: #{yolo_loss.1} parent=0 // pred_check_branch
    %296 = sbr.rel (%p294) target = $region41
  $region40: #{yolo_loss.1} parent=0 // pred_region
    %s297 = scalar_lea.vmem %s2, 24
    %v298 = vld [vmem:[%s297] sm:$0xff]
    %v299 = vadd.f32 %v298, %v288
    %300 = vst [vmem:[%s297] sm:$0xff] %v299
  $region41: #{yolo_loss.1} parent=0 // pred_fallthru
    _
  %s301 = scalar_lea.vmem %s1, 160
  %v302 = vld [vmem:[%s301] sm:$0xff]
  %s303 = scalar_lea.vmem %s1, 168
  %v304 = vld [vmem:[%s303] sm:$0xff]
  %s305 = scalar_lea.vmem %s1, 176
  %v306 = vld [vmem:[%s305] sm:$0xff]
  %vm307 = vcmp.eq.f32.partialorder %v302, 1.0
  %s308 = scalar_lea.vmem %s0, 128
  %v309 = vld [vmem:[%s308] sm:$0xff]
  %s310 = scalar_lea.vmem %s0, 136
  %v311 = vld [vmem:[%s310] sm:$0xff]
  %s312 = scalar_lea.vmem %s0, 144
  %v313 = vld [vmem:[%s312] sm:$0xff]
  %s314 = scalar_lea.vmem %s0, 152
  %v315 = vld [vmem:[%s314] sm:$0xff]
  %v316 = vxor.u32 %v309, 2147483648
  %v317 = vmul.f32 %v316, 1.442695
  %v318 = vpow.pop %v317
  %v319 = vadd.f32 %v318, 1.0
  %v320 = vrcp.pop %v319
  %v321 = vmul.f32 1.0, %v320
  %v322 = vxor.u32 %v311, 2147483648
  %v323 = vmul.f32 %v322, 1.442695
  %v324 = vpow.pop %v323
  %v325 = vadd.f32 %v324, 1.0
  %v326 = vrcp.pop %v325
  %v327 = vmul.f32 1.0, %v326
  %s328 = scalar_lea.vmem %s1, 184
  %v329 = vld [vmem:[%s328] sm:$0xff]
  %s330 = scalar_lea.vmem %s1, 192
  %v331 = vld [vmem:[%s330] sm:$0xff]
  %v332 = vsub.f32 %v321, %v304
  %v333 = vmul.f32 %v332, %v332
  %v334 = vsub.f32 %v327, %v306
  %v335 = vmul.f32 %v334, %v334
  %v336 = vadd.f32 %v333, %v335
  %v337 = vsub.f32 %v313, %v329
  %v338 = vmul.f32 %v337, %v337
  %v339 = vadd.f32 %v336, %v338
  %v340 = vsub.f32 %v315, %v331
  %v341 = vmul.f32 %v340, %v340
  %v342 = vadd.f32 %v339, %v341
  %v343 = vsel %vm307, %v342, 0.0
  %v344 = vrot.slane %v343, 4
  %v345 = vadd.f32 %v343, %v344
  %v346 = vrot.slane %v345, 2
  %v347 = vadd.f32 %v345, %v346
  %v348 = vrot.slane %v347, 1
  %v349 = vadd.f32 %v347, %v348
  %v350 = vsel %vm307, 1, 0
  %v351 = vcvt.s32.f32 %v350
  %v352 = vrot.slane %v351, 4
  %v353 = vadd.f32 %v351, %v352
  %v354 = vrot.slane %v353, 2
  %v355 = vadd.f32 %v353, %v354
  %v356 = vrot.slane %v355, 1
  %v357 = vadd.f32 %v355, %v356
  %v358 = vsel %vm68, %v349, 0.0
  %v359 = vsel %vm70, %v357, 0.0
  %v360 = vadd.f32 %v358, %v359
  // Predicated region
  $region42: #{yolo_loss.1} parent=0 // pred_check
    %p361 = pneg %p73
  $region43: #{yolo_loss.1} parent=0 // pred_check_branch
    %363 = sbr.rel (%p361) target = $region45
  $region44: #{yolo_loss.1} parent=0 // pred_region
    %s364 = scalar_lea.vmem %s2, 32
    %365 = vst [vmem:[%s364] sm:$0xff] %v360
  $region45: #{yolo_loss.1} parent=0 // pred_fallthru
    _
  // Predicated region
  $region46: #{yolo_loss.1} parent=0 // pred_check
    %p366 = pneg %p78
  $region47: #{yolo_loss.1} parent=0 // pred_check_branch
    %368 = sbr.rel (%p366) target = $region49
  $region48: #{yolo_loss.1} parent=0 // pred_region
    %s369 = scalar_lea.vmem %s2, 32
    %v370 = vld [vmem:[%s369] sm:$0xff]
    %v371 = vadd.f32 %v370, %v360
    %372 = vst [vmem:[%s369] sm:$0xff] %v371
  $region49: #{yolo_loss.1} parent=0 // pred_fallthru
    _
  %s373 = scalar_lea.vmem %s1, 200
  %v374 = vld [vmem:[%s373] sm:$0xff]
  %s375 = scalar_lea.vmem %s1, 208
  %v376 = vld [vmem:[%s375] sm:$0xff]
  %s377 = scalar_lea.vmem %s1, 216
  %v378 = vld [vmem:[%s377] sm:$0xff]
  %vm379 = vcmp.eq.f32.partialorder %v374, 1.0
  %s380 = scalar_lea.vmem %s0, 160
  %v381 = vld [vmem:[%s380] sm:$0xff]
  %s382 = scalar_lea.vmem %s0, 168
  %v383 = vld [vmem:[%s382] sm:$0xff]
  %s384 = scalar_lea.vmem %s0, 176
  %v385 = vld [vmem:[%s384] sm:$0xff]
  %s386 = scalar_lea.vmem %s0, 184
  %v387 = vld [vmem:[%s386] sm:$0xff]
  %v388 = vxor.u32 %v381, 2147483648
  %v389 = vmul.f32 %v388, 1.442695
  %v390 = vpow.pop %v389
  %v391 = vadd.f32 %v390, 1.0
  %v392 = vrcp.pop %v391
  %v393 = vmul.f32 1.0, %v392
  %v394 = vxor.u32 %v383, 2147483648
  %v395 = vmul.f32 %v394, 1.442695
  %v396 = vpow.pop %v395
  %v397 = vadd.f32 %v396, 1.0
  %v398 = vrcp.pop %v397
  %v399 = vmul.f32 1.0, %v398
  %s400 = scalar_lea.vmem %s1, 224
  %v401 = vld [vmem:[%s400] sm:$0xff]
  %s402 = scalar_lea.vmem %s1, 232
  %v403 = vld [vmem:[%s402] sm:$0xff]
  %v404 = vsub.f32 %v393, %v376
  %v405 = vmul.f32 %v404, %v404
  %v406 = vsub.f32 %v399, %v378
  %v407 = vmul.f32 %v406, %v406
  %v408 = vadd.f32 %v405, %v407
  %v409 = vsub.f32 %v385, %v401
  %v410 = vmul.f32 %v409, %v409
  %v411 = vadd.f32 %v408, %v410
  %v412 = vsub.f32 %v387, %v403
  %v413 = vmul.f32 %v412, %v412
  %v414 = vadd.f32 %v411, %v413
  %v415 = vsel %vm379, %v414, 0.0
  %v416 = vrot.slane %v415, 4
  %v417 = vadd.f32 %v415, %v416
  %v418 = vrot.slane %v417, 2
  %v419 = vadd.f32 %v417, %v418
  %v420 = vrot.slane %v419, 1
  %v421 = vadd.f32 %v419, %v420
  %v422 = vsel %vm379, 1, 0
  %v423 = vcvt.s32.f32 %v422
  %v424 = vrot.slane %v423, 4
  %v425 = vadd.f32 %v423, %v424
  %v426 = vrot.slane %v425, 2
  %v427 = vadd.f32 %v425, %v426
  %v428 = vrot.slane %v427, 1
  %v429 = vadd.f32 %v427, %v428
  %v430 = vsel %vm68, %v421, 0.0
  %v431 = vsel %vm70, %v429, 0.0
  %v432 = vadd.f32 %v430, %v431
  // Predicated region
  $region50: #{yolo_loss.1} parent=0 // pred_check
    %p433 = pneg %p73
  $region51: #{yolo_loss.1} parent=0 // pred_check_branch
    %435 = sbr.rel (%p433) target = $region53
  $region52: #{yolo_loss.1} parent=0 // pred_region
    %s436 = scalar_lea.vmem %s2, 40
    %437 = vst [vmem:[%s436] sm:$0xff] %v432
  $region53: #{yolo_loss.1} parent=0 // pred_fallthru
    _
  // Predicated region
  $region54: #{yolo_loss.1} parent=0 // pred_check
    %p438 = pneg %p78
  $region55: #{yolo_loss.1} parent=0 // pred_check_branch
    %440 = sbr.rel (%p438) target = $region57
  $region56: #{yolo_loss.1} parent=0 // pred_region
    %s441 = scalar_lea.vmem %s2, 40
    %v442 = vld [vmem:[%s441] sm:$0xff]
    %v443 = vadd.f32 %v442, %v432
    %444 = vst [vmem:[%s441] sm:$0xff] %v443
  $region57: #{yolo_loss.1} parent=0 // pred_fallthru
    _
  %s445 = scalar_lea.vmem %s1, 240
  %v446 = vld [vmem:[%s445] sm:$0xff]
  %s447 = scalar_lea.vmem %s1, 248
  %v448 = vld [vmem:[%s447] sm:$0xff]
  %s449 = scalar_lea.vmem %s1, 256
  %v450 = vld [vmem:[%s449] sm:$0xff]
  %vm451 = vcmp.eq.f32.partialorder %v446, 1.0
  %s452 = scalar_lea.vmem %s0, 192
  %v453 = vld [vmem:[%s452] sm:$0xff]
  %s454 = scalar_lea.vmem %s0, 200
  %v455 = vld [vmem:[%s454] sm:$0xff]
  %s456 = scalar_lea.vmem %s0, 208
  %v457 = vld [vmem:[%s456] sm:$0xff]
  %s458 = scalar_lea.vmem %s0, 216
  %v459 = vld [vmem:[%s458] sm:$0xff]
  %v460 = vxor.u32 %v453, 2147483648
  %v461 = vmul.f32 %v460, 1.442695
  %v462 = vpow.pop %v461
  %v463 = vadd.f32 %v462, 1.0
  %v464 = vrcp.pop %v463
  %v465 = vmul.f32 1.0, %v464
  %v466 = vxor.u32 %v455, 2147483648
  %v467 = vmul.f32 %v466, 1.442695
  %v468 = vpow.pop %v467
  %v469 = vadd.f32 %v468, 1.0
  %v470 = vrcp.pop %v469
  %v471 = vmul.f32 1.0, %v470
  %s472 = scalar_lea.vmem %s1, 264
  %v473 = vld [vmem:[%s472] sm:$0xff]
  %s474 = scalar_lea.vmem %s1, 272
  %v475 = vld [vmem:[%s474] sm:$0xff]
  %v476 = vsub.f32 %v465, %v448
  %v477 = vmul.f32 %v476, %v476
  %v478 = vsub.f32 %v471, %v450
  %v479 = vmul.f32 %v478, %v478
  %v480 = vadd.f32 %v477, %v479
  %v481 = vsub.f32 %v457, %v473
  %v482 = vmul.f32 %v481, %v481
  %v483 = vadd.f32 %v480, %v482
  %v484 = vsub.f32 %v459, %v475
  %v485 = vmul.f32 %v484, %v484
  %v486 = vadd.f32 %v483, %v485
  %v487 = vsel %vm451, %v486, 0.0
  %v488 = vrot.slane %v487, 4
  %v489 = vadd.f32 %v487, %v488
  %v490 = vrot.slane %v489, 2
  %v491 = vadd.f32 %v489, %v490
  %v492 = vrot.slane %v491, 1
  %v493 = vadd.f32 %v491, %v492
  %v494 = vsel %vm451, 1, 0
  %v495 = vcvt.s32.f32 %v494
  %v496 = vrot.slane %v495, 4
  %v497 = vadd.f32 %v495, %v496
  %v498 = vrot.slane %v497, 2
  %v499 = vadd.f32 %v497, %v498
  %v500 = vrot.slane %v499, 1
  %v501 = vadd.f32 %v499, %v500
  %v502 = vsel %vm68, %v493, 0.0
  %v503 = vsel %vm70, %v501, 0.0
  %v504 = vadd.f32 %v502, %v503
  // Predicated region
  $region58: #{yolo_loss.1} parent=0 // pred_check
    %p505 = pneg %p73
  $region59: #{yolo_loss.1} parent=0 // pred_check_branch
    %507 = sbr.rel (%p505) target = $region61
  $region60: #{yolo_loss.1} parent=0 // pred_region
    %s508 = scalar_lea.vmem %s2, 48
    %509 = vst [vmem:[%s508] sm:$0xff] %v504
  $region61: #{yolo_loss.1} parent=0 // pred_fallthru
    _
  // Predicated region
  $region62: #{yolo_loss.1} parent=0 // pred_check
    %p510 = pneg %p78
  $region63: #{yolo_loss.1} parent=0 // pred_check_branch
    %512 = sbr.rel (%p510) target = $region65
  $region64: #{yolo_loss.1} parent=0 // pred_region
    %s513 = scalar_lea.vmem %s2, 48
    %v514 = vld [vmem:[%s513] sm:$0xff]
    %v515 = vadd.f32 %v514, %v504
    %516 = vst [vmem:[%s513] sm:$0xff] %v515
  $region65: #{yolo_loss.1} parent=0 // pred_fallthru
    _
  %s517 = scalar_lea.vmem %s1, 280
  %v518 = vld [vmem:[%s517] sm:$0xff]
  %s519 = scalar_lea.vmem %s1, 288
  %v520 = vld [vmem:[%s519] sm:$0xff]
  %s521 = scalar_lea.vmem %s1, 296
  %v522 = vld [vmem:[%s521] sm:$0xff]
  %vm523 = vcmp.eq.f32.partialorder %v518, 1.0
  %s524 = scalar_lea.vmem %s0, 224
  %v525 = vld [vmem:[%s524] sm:$0xff]
  %s526 = scalar_lea.vmem %s0, 232
  %v527 = vld [vmem:[%s526] sm:$0xff]
  %s528 = scalar_lea.vmem %s0, 240
  %v529 = vld [vmem:[%s528] sm:$0xff]
  %s530 = scalar_lea.vmem %s0, 248
  %v531 = vld [vmem:[%s530] sm:$0xff]
  %v532 = vxor.u32 %v525, 2147483648
  %v533 = vmul.f32 %v532, 1.442695
  %v534 = vpow.pop %v533
  %v535 = vadd.f32 %v534, 1.0
  %v536 = vrcp.pop %v535
  %v537 = vmul.f32 1.0, %v536
  %v538 = vxor.u32 %v527, 2147483648
  %v539 = vmul.f32 %v538, 1.442695
  %v540 = vpow.pop %v539
  %v541 = vadd.f32 %v540, 1.0
  %v542 = vrcp.pop %v541
  %v543 = vmul.f32 1.0, %v542
  %s544 = scalar_lea.vmem %s1, 304
  %v545 = vld [vmem:[%s544] sm:$0xff]
  %s546 = scalar_lea.vmem %s1, 312
  %v547 = vld [vmem:[%s546] sm:$0xff]
  %v548 = vsub.f32 %v537, %v520
  %v549 = vmul.f32 %v548, %v548
  %v550 = vsub.f32 %v543, %v522
  %v551 = vmul.f32 %v550, %v550
  %v552 = vadd.f32 %v549, %v551
  %v553 = vsub.f32 %v529, %v545
  %v554 = vmul.f32 %v553, %v553
  %v555 = vadd.f32 %v552, %v554
  %v556 = vsub.f32 %v531, %v547
  %v557 = vmul.f32 %v556, %v556
  %v558 = vadd.f32 %v555, %v557
  %v559 = vsel %vm523, %v558, 0.0
  %v560 = vrot.slane %v559, 4
  %v561 = vadd.f32 %v559, %v560
  %v562 = vrot.slane %v561, 2
  %v563 = vadd.f32 %v561, %v562
  %v564 = vrot.slane %v563, 1
  %v565 = vadd.f32 %v563, %v564
  %v566 = vsel %vm523, 1, 0
  %v567 = vcvt.s32.f32 %v566
  %v568 = vrot.slane %v567, 4
  %v569 = vadd.f32 %v567, %v568
  %v570 = vrot.slane %v569, 2
  %v571 = vadd.f32 %v569, %v570
  %v572 = vrot.slane %v571, 1
  %v573 = vadd.f32 %v571, %v572
  %v574 = vsel %vm68, %v565, 0.0
  %v575 = vsel %vm70, %v573, 0.0
  %v576 = vadd.f32 %v574, %v575
  // Predicated region
  $region66: #{yolo_loss.1} parent=0 // pred_check
    %p577 = pneg %p73
  $region67: #{yolo_loss.1} parent=0 // pred_check_branch
    %579 = sbr.rel (%p577) target = $region69
  $region68: #{yolo_loss.1} parent=0 // pred_region
    %s580 = scalar_lea.vmem %s2, 56
    %581 = vst [vmem:[%s580] sm:$0xff] %v576
  $region69: #{yolo_loss.1} parent=0 // pred_fallthru
    _
  // Predicated region
  $region70: #{yolo_loss.1} parent=0 // pred_check
    %p582 = pneg %p78
  $region71: #{yolo_loss.1} parent=0 // pred_check_branch
    %584 = sbr.rel (%p582) target = $region73
  $region72: #{yolo_loss.1} parent=0 // pred_region
    %s585 = scalar_lea.vmem %s2, 56
    %v586 = vld [vmem:[%s585] sm:$0xff]
    %v587 = vadd.f32 %v586, %v576
    %588 = vst [vmem:[%s585] sm:$0xff] %v587
  $region73: #{yolo_loss.1} parent=0 // pred_fallthru
    _
  %s589 = scalar_lea.vmem %s1, 320
  %v590 = vld [vmem:[%s589] sm:$0xff]
  %s591 = scalar_lea.vmem %s1, 328
  %v592 = vld [vmem:[%s591] sm:$0xff]
  %s593 = scalar_lea.vmem %s1, 336
  %v594 = vld [vmem:[%s593] sm:$0xff]
  %vm595 = vcmp.eq.f32.partialorder %v590, 1.0
  %s596 = scalar_lea.vmem %s0, 256
  %v597 = vld [vmem:[%s596] sm:$0xff]
  %s598 = scalar_lea.vmem %s0, 264
  %v599 = vld [vmem:[%s598] sm:$0xff]
  %s600 = scalar_lea.vmem %s0, 272
  %v601 = vld [vmem:[%s600] sm:$0xff]
  %s602 = scalar_lea.vmem %s0, 280
  %v603 = vld [vmem:[%s602] sm:$0xff]
  %v604 = vxor.u32 %v597, 2147483648
  %v605 = vmul.f32 %v604, 1.442695
  %v606 = vpow.pop %v605
  %v607 = vadd.f32 %v606, 1.0
  %v608 = vrcp.pop %v607
  %v609 = vmul.f32 1.0, %v608
  %v610 = vxor.u32 %v599, 2147483648
  %v611 = vmul.f32 %v610, 1.442695
  %v612 = vpow.pop %v611
  %v613 = vadd.f32 %v612, 1.0
  %v614 = vrcp.pop %v613
  %v615 = vmul.f32 1.0, %v614
  %s616 = scalar_lea.vmem %s1, 344
  %v617 = vld [vmem:[%s616] sm:$0xff]
  %s618 = scalar_lea.vmem %s1, 352
  %v619 = vld [vmem:[%s618] sm:$0xff]
  %v620 = vsub.f32 %v609, %v592
  %v621 = vmul.f32 %v620, %v620
  %v622 = vsub.f32 %v615, %v594
  %v623 = vmul.f32 %v622, %v622
  %v624 = vadd.f32 %v621, %v623
  %v625 = vsub.f32 %v601, %v617
  %v626 = vmul.f32 %v625, %v625
  %v627 = vadd.f32 %v624, %v626
  %v628 = vsub.f32 %v603, %v619
  %v629 = vmul.f32 %v628, %v628
  %v630 = vadd.f32 %v627, %v629
  %v631 = vsel %vm595, %v630, 0.0
  %v632 = vrot.slane %v631, 4
  %v633 = vadd.f32 %v631, %v632
  %v634 = vrot.slane %v633, 2
  %v635 = vadd.f32 %v633, %v634
  %v636 = vrot.slane %v635, 1
  %v637 = vadd.f32 %v635, %v636
  %v638 = vsel %vm595, 1, 0
  %v639 = vcvt.s32.f32 %v638
  %v640 = vrot.slane %v639, 4
  %v641 = vadd.f32 %v639, %v640
  %v642 = vrot.slane %v641, 2
  %v643 = vadd.f32 %v641, %v642
  %v644 = vrot.slane %v643, 1
  %v645 = vadd.f32 %v643, %v644
  %v646 = vsel %vm68, %v637, 0.0
  %v647 = vsel %vm70, %v645, 0.0
  %v648 = vadd.f32 %v646, %v647
  // Predicated region
  $region74: #{yolo_loss.1} parent=0 // pred_check
    %p649 = pneg %p73
  $region75: #{yolo_loss.1} parent=0 // pred_check_branch
    %651 = sbr.rel (%p649) target = $region77
  $region76: #{yolo_loss.1} parent=0 // pred_region
    %s652 = scalar_lea.vmem %s2, 64
    %653 = vst [vmem:[%s652] sm:$0xff] %v648
  $region77: #{yolo_loss.1} parent=0 // pred_fallthru
    _
  // Predicated region
  $region78: #{yolo_loss.1} parent=0 // pred_check
    %p654 = pneg %p78
  $region79: #{yolo_loss.1} parent=0 // pred_check_branch
    %656 = sbr.rel (%p654) target = $region81
  $region80: #{yolo_loss.1} parent=0 // pred_region
    %s657 = scalar_lea.vmem %s2, 64
    %v658 = vld [vmem:[%s657] sm:$0xff]
    %v659 = vadd.f32 %v658, %v648
    %660 = vst [vmem:[%s657] sm:$0xff] %v659
  $region81: #{yolo_loss.1} parent=0 // pred_fallthru
    _
  // Predicated region
  $region82: #{yolo_loss.1} parent=0 // pred_check
    _
  $region83: #{yolo_loss.1} parent=0 // pred_check_branch
    %662 = sbr.rel (0) target = $region85
  $region84: #{yolo_loss.1} parent=0 // pred_region
    _
  $region85: #{yolo_loss.1} parent=0 // pred_fallthru
    _
  // Predicated region
  $region86: #{yolo_loss.1} parent=0 // pred_check
    _
  $region87: #{yolo_loss.1} parent=0 // pred_check_branch
    %664 = sbr.rel (0) target = $region89
  $region88: #{yolo_loss.1} parent=0 // pred_region
    _
  $region89: #{yolo_loss.1} parent=0 // pred_fallthru
    _

</llo_original>
